<compile_context>
chip_gen: v6e
topology: v6e:2x2x1
jax: 0.10.0
libtpu: 0.0.40
codegen_flags: <defaults>
</compile_context>

<pallas_src>
import jax
import jax.numpy as jnp
from jax.experimental import pallas as pl
from jax.experimental.pallas import tpu as pltpu


# ----------------------------- Pallas kernel -----------------------------

def _self_attn_kernel(x_ref, wq_ref, bq_ref, wk_ref, bk_ref, wv_ref, bv_ref,
                      g_ref, o_ref):
    # x_ref: (C, N) f32 for one batch element, N lane-dense.
    x = x_ref[...]
    xb = x.astype(jnp.bfloat16)

    # 1x1 convs == channel-mixing matmuls; weights are in torch (out_ch, in_ch) layout.
    q = jnp.dot(wq_ref[...], xb, preferred_element_type=jnp.float32) + bq_ref[...]  # (Cqk, N)
    k = jnp.dot(wk_ref[...], xb, preferred_element_type=jnp.float32) + bk_ref[...]  # (Cqk, N)
    v = jnp.dot(wv_ref[...], xb, preferred_element_type=jnp.float32) + bv_ref[...]  # (C,   N)

    # energy[i, j] = sum_c q[c, i] * k[c, j]   (== torch.bmm(q^T, k))
    energy = jnp.einsum("ci,cj->ij",
                        q.astype(jnp.bfloat16), k.astype(jnp.bfloat16),
                        preferred_element_type=jnp.float32)                          # (N, N)

    # Row softmax over the last (lane) dim; stats kept in f32.
    m = jnp.max(energy, axis=-1, keepdims=True)
    p = jnp.exp(energy - m)
    att = p / jnp.sum(p, axis=-1, keepdims=True)

    # out[c, i] = sum_j v[c, j] * att[i, j]    (== torch.bmm(v, att^T))
    out = jnp.einsum("cj,ij->ci",
                     v.astype(jnp.bfloat16), att.astype(jnp.bfloat16),
                     preferred_element_type=jnp.float32)                             # (C, N)

    # gamma * out + residual, f32, lane-dense store.
    o_ref[...] = g_ref[...] * out + x


# ----------------------------- wrapper -----------------------------

def self_attn(x_nchw, params):
    """x_nchw: (B, C, W, H) float32; params in torch layouts (see build_params)."""
    B, C, W, H = x_nchw.shape
    N = W * H
    cqk = params["wq"].shape[0]

    x_cn = x_nchw.reshape(B, C, N).astype(jnp.float32)          # native (B, C, N) — no transpose
    wq = params["wq"].astype(jnp.bfloat16)
    wk = params["wk"].astype(jnp.bfloat16)
    wv = params["wv"].astype(jnp.bfloat16)

    out = pl.pallas_call(
        _self_attn_kernel,
        out_shape=jax.ShapeDtypeStruct((B, C, N), jnp.float32),
        grid=(B,),
        in_specs=[
            pl.BlockSpec((None, C, N), lambda b: (b, 0, 0)),     # x, one batch per step
            pl.BlockSpec((cqk, C), lambda b: (0, 0)),            # Wq
            pl.BlockSpec((cqk, 1), lambda b: (0, 0)),            # bq
            pl.BlockSpec((cqk, C), lambda b: (0, 0)),            # Wk
            pl.BlockSpec((cqk, 1), lambda b: (0, 0)),            # bk
            pl.BlockSpec((C, C), lambda b: (0, 0)),              # Wv
            pl.BlockSpec((C, 1), lambda b: (0, 0)),              # bv
            pl.BlockSpec((1, 1), lambda b: (0, 0)),              # gamma
        ],
        out_specs=pl.BlockSpec((None, C, N), lambda b: (b, 0, 0)),
        compiler_params=pltpu.CompilerParams(
            dimension_semantics=("parallel",)),                  # v7x: one batch per TensorCore
    )(x_cn, wq, params["bq"], wk, params["bk"], wv, params["bv"], params["gamma"])

    return out.reshape(B, C, W, H)


# ----------------------------- pure-JAX reference (f32) -----------------------------

def self_attn_ref(x_nchw, params):
    B, C, W, H = x_nchw.shape
    N = W * H
    x = x_nchw.reshape(B, C, N).astype(jnp.float32)
    q = jnp.einsum("oc,bcn->bon", params["wq"], x) + params["bq"][None]
    k = jnp.einsum("oc,bcn->bon", params["wk"], x) + params["bk"][None]
    v = jnp.einsum("oc,bcn->bon", params["wv"], x) + params["bv"][None]
    energy = jnp.einsum("bci,bcj->bij", q, k)
    att = jax.nn.softmax(energy, axis=-1)
    out = jnp.einsum("bcj,bij->bci", v, att)
    out = params["gamma"].reshape(()) * out + x
    return out.reshape(B, C, W, H)


# ----------------------------- parameters -----------------------------

def build_params(seed=1, in_dim=32):
    key = jax.random.PRNGKey(seed)
    ks = jax.random.split(key, 6)
    cqk = max(in_dim // 8, 1)
    scale = in_dim ** -0.5
    return dict(
        wq=scale * jax.random.normal(ks[0], (cqk, in_dim), jnp.float32),
        bq=0.01 * jax.random.normal(ks[1], (cqk, 1), jnp.float32),
        wk=scale * jax.random.normal(ks[2], (cqk, in_dim), jnp.float32),
        bk=0.01 * jax.random.normal(ks[3], (cqk, 1), jnp.float32),
        wv=scale * jax.random.normal(ks[4], (in_dim, in_dim), jnp.float32),
        bv=0.01 * jax.random.normal(ks[5], (in_dim, 1), jnp.float32),
        gamma=jnp.zeros((1, 1), jnp.float32),   # torch: nn.Parameter(torch.zeros(1))
    )


if __name__ == "__main__":
    IN_DIM, BATCH, SPATIAL = 32, 2, 16          # in_dim must be >= 8 so in_dim // 8 >= 1
    params = build_params(seed=1, in_dim=IN_DIM)
    x = jax.random.normal(jax.random.PRNGKey(0),
                          (BATCH, IN_DIM, SPATIAL, SPATIAL), jnp.float32)

    # 1) Faithful torch init (gamma = 0): out must equal x exactly.
    out0 = jax.block_until_ready(self_attn(x, params))
    assert out0.shape == x.shape, out0.shape
    assert bool(jnp.all(jnp.isfinite(out0)))
    assert bool(jnp.allclose(out0, x, atol=1e-6))

    # 2) Non-zero gamma: exercises the full attention path; compare vs f32 JAX reference
    #    (bf16 MXU operands -> loose tolerance).
    params_g = dict(params, gamma=jnp.full((1, 1), 0.7, jnp.float32))
    out1 = jax.block_until_ready(self_attn(x, params_g))
    ref1 = self_attn_ref(x, params_g)
    err = float(jnp.max(jnp.abs(out1 - ref1)))
    assert err < 1e-1, err

    print("KERNEL_OK")
</pallas_src>

<mosaic_0001>
module attributes {stable_mosaic.version = 11 : i64} {
  func.func @_self_attn_kernel(%arg0: i32, %arg1: memref<1x32x256xf32, #tpu.memory_space<vmem>>, %arg2: memref<4x32xbf16, #tpu.memory_space<vmem>>, %arg3: memref<4x1xf32, #tpu.memory_space<vmem>>, %arg4: memref<4x32xbf16, #tpu.memory_space<vmem>>, %arg5: memref<4x1xf32, #tpu.memory_space<vmem>>, %arg6: memref<32x32xbf16, #tpu.memory_space<vmem>>, %arg7: memref<32x1xf32, #tpu.memory_space<vmem>>, %arg8: memref<1x1xf32, #tpu.memory_space<vmem>>, %arg9: memref<1x32x256xf32, #tpu.memory_space<vmem>>) attributes {dimension_semantics = [#tpu.dimension_semantics<parallel>], iteration_bounds = array<i64: 2>, scalar_prefetch = 0 : i64, scratch_operands = 0 : i64, tpu.core_type = #tpu.core_type<tc>, window_params = [{transform_indices = @transform_0, window_bounds = array<i64: 1, 32, 256>}, {pipeline_mode = #tpu.pipeline_mode<synchronous>, transform_indices = @transform_1, window_bounds = array<i64: 4, 32>}, {pipeline_mode = #tpu.pipeline_mode<synchronous>, transform_indices = @transform_2, window_bounds = array<i64: 4, 1>}, {pipeline_mode = #tpu.pipeline_mode<synchronous>, transform_indices = @transform_3, window_bounds = array<i64: 4, 32>}, {pipeline_mode = #tpu.pipeline_mode<synchronous>, transform_indices = @transform_4, window_bounds = array<i64: 4, 1>}, {pipeline_mode = #tpu.pipeline_mode<synchronous>, transform_indices = @transform_5, window_bounds = array<i64: 32, 32>}, {pipeline_mode = #tpu.pipeline_mode<synchronous>, transform_indices = @transform_6, window_bounds = array<i64: 32, 1>}, {pipeline_mode = #tpu.pipeline_mode<synchronous>, transform_indices = @transform_7, window_bounds = array<i64: 1, 1>}, {transform_indices = @transform_8, window_bounds = array<i64: 1, 32, 256>}]} {
    %c0 = arith.constant 0 : index
    %c0_0 = arith.constant 0 : index
    %c0_1 = arith.constant 0 : index
    %0 = vector.load %arg1[%c0, %c0_0, %c0_1] : memref<1x32x256xf32, #tpu.memory_space<vmem>>, vector<1x32x256xf32>
    %1 = vector.shape_cast %0 : vector<1x32x256xf32> to vector<32x256xf32>
    %2 = arith.truncf %1 : vector<32x256xf32> to vector<32x256xbf16>
    %c0_2 = arith.constant 0 : index
    %c0_3 = arith.constant 0 : index
    %3 = vector.load %arg2[%c0_2, %c0_3] : memref<4x32xbf16, #tpu.memory_space<vmem>>, vector<4x32xbf16>
    %cst = arith.constant dense<0.000000e+00> : vector<4x256xf32>
    %4 = tpu.matmul %3, %2, %cst {dimension_numbers = #tpu.dot_dimension_numbers<[1], [0], [0], [1], [0, 0, 1, 1], [], []>} : vector<4x32xbf16>, vector<32x256xbf16>, vector<4x256xf32> -> vector<4x256xf32>
    %c0_4 = arith.constant 0 : index
    %c0_5 = arith.constant 0 : index
    %5 = vector.load %arg3[%c0_4, %c0_5] : memref<4x1xf32, #tpu.memory_space<vmem>>, vector<4x1xf32>
    %6 = vector.broadcast %5 : vector<4x1xf32> to vector<4x256xf32>
    %7 = arith.addf %4, %6 : vector<4x256xf32>
    %c0_6 = arith.constant 0 : index
    %c0_7 = arith.constant 0 : index
    %8 = vector.load %arg4[%c0_6, %c0_7] : memref<4x32xbf16, #tpu.memory_space<vmem>>, vector<4x32xbf16>
    %cst_8 = arith.constant dense<0.000000e+00> : vector<4x256xf32>
    %9 = tpu.matmul %8, %2, %cst_8 {dimension_numbers = #tpu.dot_dimension_numbers<[1], [0], [0], [1], [0, 0, 1, 1], [], []>} : vector<4x32xbf16>, vector<32x256xbf16>, vector<4x256xf32> -> vector<4x256xf32>
    %c0_9 = arith.constant 0 : index
    %c0_10 = arith.constant 0 : index
    %10 = vector.load %arg5[%c0_9, %c0_10] : memref<4x1xf32, #tpu.memory_space<vmem>>, vector<4x1xf32>
    %11 = vector.broadcast %10 : vector<4x1xf32> to vector<4x256xf32>
    %12 = arith.addf %9, %11 : vector<4x256xf32>
    %c0_11 = arith.constant 0 : index
    %c0_12 = arith.constant 0 : index
    %13 = vector.load %arg6[%c0_11, %c0_12] : memref<32x32xbf16, #tpu.memory_space<vmem>>, vector<32x32xbf16>
    %cst_13 = arith.constant dense<0.000000e+00> : vector<32x256xf32>
    %14 = tpu.matmul %13, %2, %cst_13 {dimension_numbers = #tpu.dot_dimension_numbers<[1], [0], [0], [1], [0, 0, 1, 1], [], []>} : vector<32x32xbf16>, vector<32x256xbf16>, vector<32x256xf32> -> vector<32x256xf32>
    %c0_14 = arith.constant 0 : index
    %c0_15 = arith.constant 0 : index
    %15 = vector.load %arg7[%c0_14, %c0_15] : memref<32x1xf32, #tpu.memory_space<vmem>>, vector<32x1xf32>
    %16 = vector.broadcast %15 : vector<32x1xf32> to vector<32x256xf32>
    %17 = arith.addf %14, %16 : vector<32x256xf32>
    %18 = arith.truncf %7 : vector<4x256xf32> to vector<4x256xbf16>
    %19 = arith.truncf %12 : vector<4x256xf32> to vector<4x256xbf16>
    "tpu.trace_start"() <{level = 10 : i32, message = "ci,cj->ij"}> : () -> ()
    %cst_16 = arith.constant dense<0.000000e+00> : vector<256x256xf32>
    %20 = tpu.matmul %18, %19, %cst_16 {dimension_numbers = #tpu.dot_dimension_numbers<[0], [0], [1], [1], [0, 1, 1, 1], [], []>} : vector<4x256xbf16>, vector<4x256xbf16>, vector<256x256xf32> -> vector<256x256xf32>
    "tpu.trace_stop"() : () -> ()
    %cst_17 = arith.constant dense<0xFF800000> : vector<256xf32>
    %21 = vector.multi_reduction <maximumf>, %20, %cst_17 [1] : vector<256x256xf32> to vector<256xf32>
    %22 = vector.shape_cast %21 : vector<256xf32> to vector<256x1xf32>
    %23 = vector.broadcast %22 : vector<256x1xf32> to vector<256x256xf32>
    %24 = arith.subf %20, %23 : vector<256x256xf32>
    %25 = math.exp %24 : vector<256x256xf32>
    %cst_18 = arith.constant dense<0.000000e+00> : vector<256xf32>
    %26 = vector.multi_reduction <add>, %25, %cst_18 [1] : vector<256x256xf32> to vector<256xf32>
    %27 = vector.shape_cast %26 : vector<256xf32> to vector<256x1xf32>
    %28 = vector.broadcast %27 : vector<256x1xf32> to vector<256x256xf32>
    %29 = arith.divf %25, %28 : vector<256x256xf32>
    %30 = arith.truncf %17 : vector<32x256xf32> to vector<32x256xbf16>
    %31 = arith.truncf %29 : vector<256x256xf32> to vector<256x256xbf16>
    "tpu.trace_start"() <{level = 10 : i32, message = "cj,ij->ci"}> : () -> ()
    %cst_19 = arith.constant dense<0.000000e+00> : vector<32x256xf32>
    %32 = tpu.matmul %30, %31, %cst_19 {dimension_numbers = #tpu.dot_dimension_numbers<[1], [1], [0], [0], [0, 0, 1, 0], [], []>} : vector<32x256xbf16>, vector<256x256xbf16>, vector<32x256xf32> -> vector<32x256xf32>
    "tpu.trace_stop"() : () -> ()
    %c0_20 = arith.constant 0 : index
    %c0_21 = arith.constant 0 : index
    %33 = vector.load %arg8[%c0_20, %c0_21] : memref<1x1xf32, #tpu.memory_space<vmem>>, vector<1x1xf32>
    %34 = vector.broadcast %33 : vector<1x1xf32> to vector<32x256xf32>
    %35 = arith.mulf %34, %32 : vector<32x256xf32>
    %36 = arith.addf %35, %1 : vector<32x256xf32>
    %c0_22 = arith.constant 0 : index
    %c0_23 = arith.constant 0 : index
    %c0_24 = arith.constant 0 : index
    %37 = vector.load %arg9[%c0_22, %c0_23, %c0_24] : memref<1x32x256xf32, #tpu.memory_space<vmem>>, vector<1x32x256xf32>
    %38 = vector.shape_cast %37 : vector<1x32x256xf32> to vector<32x256xf32>
    %39 = vector.shape_cast %36 : vector<32x256xf32> to vector<1x32x256xf32>
    tpu.vector_store %arg9[%c0_22, %c0_23, %c0_24], %39 {strides = array<i32>} : memref<1x32x256xf32, #tpu.memory_space<vmem>>, vector<1x32x256xf32>,
    return
  }
  func.func @transform_0(%arg0: i32) -> (i32, i32, i32) {
    %c0_i32 = arith.constant 0 : i32
    %c0_i32_0 = arith.constant 0 : i32
    %c0_i32_1 = arith.constant 0 : i32
    return %arg0, %c0_i32, %c0_i32_0 : i32, i32, i32
  }
  func.func @transform_1(%arg0: i32) -> (i32, i32) {
    %c0_i32 = arith.constant 0 : i32
    %c0_i32_0 = arith.constant 0 : i32
    %c0_i32_1 = arith.constant 0 : i32
    return %c0_i32, %c0_i32_0 : i32, i32
  }
  func.func @transform_2(%arg0: i32) -> (i32, i32) {
    %c0_i32 = arith.constant 0 : i32
    %c0_i32_0 = arith.constant 0 : i32
    %c0_i32_1 = arith.constant 0 : i32
    return %c0_i32, %c0_i32_0 : i32, i32
  }
  func.func @transform_3(%arg0: i32) -> (i32, i32) {
    %c0_i32 = arith.constant 0 : i32
    %c0_i32_0 = arith.constant 0 : i32
    %c0_i32_1 = arith.constant 0 : i32
    return %c0_i32, %c0_i32_0 : i32, i32
  }
  func.func @transform_4(%arg0: i32) -> (i32, i32) {
    %c0_i32 = arith.constant 0 : i32
    %c0_i32_0 = arith.constant 0 : i32
    %c0_i32_1 = arith.constant 0 : i32
    return %c0_i32, %c0_i32_0 : i32, i32
  }
  func.func @transform_5(%arg0: i32) -> (i32, i32) {
    %c0_i32 = arith.constant 0 : i32
    %c0_i32_0 = arith.constant 0 : i32
    %c0_i32_1 = arith.constant 0 : i32
    return %c0_i32, %c0_i32_0 : i32, i32
  }
  func.func @transform_6(%arg0: i32) -> (i32, i32) {
    %c0_i32 = arith.constant 0 : i32
    %c0_i32_0 = arith.constant 0 : i32
    %c0_i32_1 = arith.constant 0 : i32
    return %c0_i32, %c0_i32_0 : i32, i32
  }
  func.func @transform_7(%arg0: i32) -> (i32, i32) {
    %c0_i32 = arith.constant 0 : i32
    %c0_i32_0 = arith.constant 0 : i32
    %c0_i32_1 = arith.constant 0 : i32
    return %c0_i32, %c0_i32_0 : i32, i32
  }
  func.func @transform_8(%arg0: i32) -> (i32, i32, i32) {
    %c0_i32 = arith.constant 0 : i32
    %c0_i32_0 = arith.constant 0 : i32
    %c0_i32_1 = arith.constant 0 : i32
    return %arg0, %c0_i32, %c0_i32_0 : i32, i32, i32
  }
}

</mosaic_0001>

<llo_original>
// kernel: tpu_custom_call.1
$region0: #{tpu_custom_call.1}
  #allocation0 [shape = 'u32[]', space=smem, size = 0x4, offset = 0x4, fixed_abs, tag = 'smem constant byte address 0x4 - core index']
  #allocation1 [shape = 'u32[144,128]{1,0:T(1,128)}', space=vmem, size = 0x12000, scoped, tag = 'internal scratch']
  #allocation2 [shape = 'f32[1,1]{1,0:T(1,128)S(1)}', space=vmem, size = 0x200, scoped, tag = 'scoped memory for tpu_custom_call.1']
  %s0 = inlined_call_operand.hbm [shape: f32[2,32,256], index: 0, kind: input, shape index: {}]
  %s1 = inlined_call_operand.vmem [shape: bf16[4,32], index: 1, kind: input, shape index: {}]
  %s2 = inlined_call_operand.vmem [shape: f32[4,1], index: 2, kind: input, shape index: {}]
  %s3 = inlined_call_operand.vmem [shape: bf16[4,32], index: 3, kind: input, shape index: {}]
  %s4 = inlined_call_operand.vmem [shape: f32[4,1], index: 4, kind: input, shape index: {}]
  %s5 = inlined_call_operand.vmem [shape: bf16[32,32], index: 5, kind: input, shape index: {}]
  %s6 = inlined_call_operand.vmem [shape: f32[32,1], index: 6, kind: input, shape index: {}]
  %s7 = inlined_call_operand.<no memory space> [shape: f32[1,1], index: 7, kind: input, shape index: {}]
  %s8 = inlined_call_operand.hbm [shape: f32[2,32,256], index: 8, kind: output, shape index: {}]
  %s9 = sld [smem:[#allocation0]]
  $region69: #{tpu_custom_call.1} parent=0
    _
  %s11 = ssub.s32 1, %s9
  %s12 = scalar_select 0, %s11, %s9
  %v13 = vstv %s7
  %14 = vst [vmem:[#allocation2] sm:$0x1] %v13
  $region1: #{tpu_custom_call.1} parent=0
    #allocation3 [shape = 'u8[65536]{0}', space=vmem, size = 0x10000, scoped, tag = 'input window, operand 0']
    #allocation4 [shape = 's32[2]{0}', space=sflag, size = 0x8, scoped, tag = 'scoped memory for tpu_custom_call.1']
    #allocation5 [shape = 's32[2]{0}', space=sflag, size = 0x8, scoped, tag = 'scoped memory for tpu_custom_call.1']
    #allocation6 [shape = 'u8[65536]{0}', space=vmem, size = 0x10000, scoped, tag = 'output window, operand 0']
    %15 = vsyncpa [#allocation4], 0
    %s16 = scalar_lea.sflag [#allocation4], 1
    %17 = vsyncpa %s16, 0
    %18 = vsyncpa [#allocation5], 0
    %s19 = scalar_lea.sflag [#allocation5], 1
    %20 = vsyncpa %s19, 0
    loop: start=0, step=1, limit=4
    $region2: #{tpu_custom_call.1} parent=1 // loop_pre_header
      _
    $region3: #{tpu_custom_call.1} parent=1 // loop_header
      %s22 = sphi 0, %s26
      %p23 = scmp.ge.s32.totalorder %s22, 4
      %s32 = sphi 0, %s34
      %s35 = sphi 0, %s32
      %s36 = sphi 0, %s35
      %s52 = sphi 0, %s36
      %s56 = sphi 0, %s56
      %s58 = sphi 0, %s56
      %s59 = sphi 0, %s58
      %s73 = sphi 0, %s59
      %s77 = sphi 0, %s77
      %s79 = sphi 0, %s77
      %s80 = sphi 0, %s79
      %s94 = sphi 0, %s80
      %s98 = sphi 0, %s98
      %s100 = sphi 0, %s98
      %s101 = sphi 0, %s100
      %s115 = sphi 0, %s101
      %s119 = sphi 0, %s119
      %s121 = sphi 0, %s119
      %s122 = sphi 0, %s121
      %s136 = sphi 0, %s122
      %s140 = sphi 0, %s140
      %s142 = sphi 0, %s140
      %s143 = sphi 0, %s142
      %s157 = sphi 0, %s143
      %s161 = sphi 0, %s161
      %s163 = sphi 0, %s161
      %s164 = sphi 0, %s163
      %s178 = sphi 0, %s164
      %s182 = sphi 0, %s182
      %s184 = sphi 0, %s182
      %s185 = sphi 0, %s184
      %s199 = sphi 0, %s185
      %s205 = sphi 0, %s207
      %s208 = sphi 0, %s205
      %s209 = sphi 0, %s208
      %s225 = sphi 0, %s209
    $region4: #{tpu_custom_call.1} parent=1 // loop_header_branch
      %25 = sbr.rel (%p23) target = $region8
    $region5: #{tpu_custom_call.1} parent=1 // loop_body
      %s27 = ssub.s32 %s22, 1
      %s28 = ssub.s32 %s22, 2
      %s29 = sadd.s32 %s22, 1
      %s30 = ssub.s32 %s22, %s29
      %p31 = scmp.eq.s32.totalorder %s30, 0
      %s33 = sadd.s32 %s32, 1
      %s34 = scalar_select %p31, %s32, %s33
      %p37 = pneg %p31
      %p38 = scmp.eq.s32.totalorder %s22, 1
      %p39 = por %p37, %p38
      %p40 = scmp.ne.s32.totalorder %s32, %s35
      %p41 = scmp.eq.s32.totalorder %s22, 0
      %p42 = por %p40, %p41
      %p43 = scmp.ne.s32.totalorder %s32, %s35
      %p44 = scmp.eq.s32.totalorder %s27, 1
      %p45 = por %p43, %p44
      %p46 = scmp.ne.s32.totalorder %s35, %s36
      %p47 = scmp.eq.s32.totalorder %s27, 0
      %p48 = por %p46, %p47
      %p49 = scmp.ne.s32.totalorder %s35, %s36
      %p50 = scmp.eq.s32.totalorder %s28, 1
      %p51 = por %p49, %p50
      %p53 = scmp.ne.s32.totalorder %s36, %s52
      %p54 = scmp.eq.s32.totalorder %s28, 0
      %p55 = por %p53, %p54
      %s57 = sadd.s32 %s56, 1
      %p60 = scmp.eq.s32.totalorder %s22, 1
      %p61 = scmp.ne.s32.totalorder %s56, %s58
      %p62 = scmp.eq.s32.totalorder %s22, 0
      %p63 = por %p61, %p62
      %p64 = scmp.ne.s32.totalorder %s56, %s58
      %p65 = scmp.eq.s32.totalorder %s27, 1
      %p66 = por %p64, %p65
      %p67 = scmp.ne.s32.totalorder %s58, %s59
      %p68 = scmp.eq.s32.totalorder %s27, 0
      %p69 = por %p67, %p68
      %p70 = scmp.ne.s32.totalorder %s58, %s59
      %p71 = scmp.eq.s32.totalorder %s28, 1
      %p72 = por %p70, %p71
      %p74 = scmp.ne.s32.totalorder %s59, %s73
      %p75 = scmp.eq.s32.totalorder %s28, 0
      %p76 = por %p74, %p75
      %s78 = sadd.s32 %s77, 1
      %p81 = scmp.eq.s32.totalorder %s22, 1
      %p82 = scmp.ne.s32.totalorder %s77, %s79
      %p83 = scmp.eq.s32.totalorder %s22, 0
      %p84 = por %p82, %p83
      %p85 = scmp.ne.s32.totalorder %s77, %s79
      %p86 = scmp.eq.s32.totalorder %s27, 1
      %p87 = por %p85, %p86
      %p88 = scmp.ne.s32.totalorder %s79, %s80
      %p89 = scmp.eq.s32.totalorder %s27, 0
      %p90 = por %p88, %p89
      %p91 = scmp.ne.s32.totalorder %s79, %s80
      %p92 = scmp.eq.s32.totalorder %s28, 1
      %p93 = por %p91, %p92
      %p95 = scmp.ne.s32.totalorder %s80, %s94
      %p96 = scmp.eq.s32.totalorder %s28, 0
      %p97 = por %p95, %p96
      %s99 = sadd.s32 %s98, 1
      %p102 = scmp.eq.s32.totalorder %s22, 1
      %p103 = scmp.ne.s32.totalorder %s98, %s100
      %p104 = scmp.eq.s32.totalorder %s22, 0
      %p105 = por %p103, %p104
      %p106 = scmp.ne.s32.totalorder %s98, %s100
      %p107 = scmp.eq.s32.totalorder %s27, 1
      %p108 = por %p106, %p107
      %p109 = scmp.ne.s32.totalorder %s100, %s101
      %p110 = scmp.eq.s32.totalorder %s27, 0
      %p111 = por %p109, %p110
      %p112 = scmp.ne.s32.totalorder %s100, %s101
      %p113 = scmp.eq.s32.totalorder %s28, 1
      %p114 = por %p112, %p113
      %p116 = scmp.ne.s32.totalorder %s101, %s115
      %p117 = scmp.eq.s32.totalorder %s28, 0
      %p118 = por %p116, %p117
      %s120 = sadd.s32 %s119, 1
      %p123 = scmp.eq.s32.totalorder %s22, 1
      %p124 = scmp.ne.s32.totalorder %s119, %s121
      %p125 = scmp.eq.s32.totalorder %s22, 0
      %p126 = por %p124, %p125
      %p127 = scmp.ne.s32.totalorder %s119, %s121
      %p128 = scmp.eq.s32.totalorder %s27, 1
      %p129 = por %p127, %p128
      %p130 = scmp.ne.s32.totalorder %s121, %s122
      %p131 = scmp.eq.s32.totalorder %s27, 0
      %p132 = por %p130, %p131
      %p133 = scmp.ne.s32.totalorder %s121, %s122
      %p134 = scmp.eq.s32.totalorder %s28, 1
      %p135 = por %p133, %p134
      %p137 = scmp.ne.s32.totalorder %s122, %s136
      %p138 = scmp.eq.s32.totalorder %s28, 0
      %p139 = por %p137, %p138
      %s141 = sadd.s32 %s140, 1
      %p144 = scmp.eq.s32.totalorder %s22, 1
      %p145 = scmp.ne.s32.totalorder %s140, %s142
      %p146 = scmp.eq.s32.totalorder %s22, 0
      %p147 = por %p145, %p146
      %p148 = scmp.ne.s32.totalorder %s140, %s142
      %p149 = scmp.eq.s32.totalorder %s27, 1
      %p150 = por %p148, %p149
      %p151 = scmp.ne.s32.totalorder %s142, %s143
      %p152 = scmp.eq.s32.totalorder %s27, 0
      %p153 = por %p151, %p152
      %p154 = scmp.ne.s32.totalorder %s142, %s143
      %p155 = scmp.eq.s32.totalorder %s28, 1
      %p156 = por %p154, %p155
      %p158 = scmp.ne.s32.totalorder %s143, %s157
      %p159 = scmp.eq.s32.totalorder %s28, 0
      %p160 = por %p158, %p159
      %s162 = sadd.s32 %s161, 1
      %p165 = scmp.eq.s32.totalorder %s22, 1
      %p166 = scmp.ne.s32.totalorder %s161, %s163
      %p167 = scmp.eq.s32.totalorder %s22, 0
      %p168 = por %p166, %p167
      %p169 = scmp.ne.s32.totalorder %s161, %s163
      %p170 = scmp.eq.s32.totalorder %s27, 1
      %p171 = por %p169, %p170
      %p172 = scmp.ne.s32.totalorder %s163, %s164
      %p173 = scmp.eq.s32.totalorder %s27, 0
      %p174 = por %p172, %p173
      %p175 = scmp.ne.s32.totalorder %s163, %s164
      %p176 = scmp.eq.s32.totalorder %s28, 1
      %p177 = por %p175, %p176
      %p179 = scmp.ne.s32.totalorder %s164, %s178
      %p180 = scmp.eq.s32.totalorder %s28, 0
      %p181 = por %p179, %p180
      %s183 = sadd.s32 %s182, 1
      %p186 = scmp.eq.s32.totalorder %s22, 1
      %p187 = scmp.ne.s32.totalorder %s182, %s184
      %p188 = scmp.eq.s32.totalorder %s22, 0
      %p189 = por %p187, %p188
      %p190 = scmp.ne.s32.totalorder %s182, %s184
      %p191 = scmp.eq.s32.totalorder %s27, 1
      %p192 = por %p190, %p191
      %p193 = scmp.ne.s32.totalorder %s184, %s185
      %p194 = scmp.eq.s32.totalorder %s27, 0
      %p195 = por %p193, %p194
      %p196 = scmp.ne.s32.totalorder %s184, %s185
      %p197 = scmp.eq.s32.totalorder %s28, 1
      %p198 = por %p196, %p197
      %p200 = scmp.ne.s32.totalorder %s185, %s199
      %p201 = scmp.eq.s32.totalorder %s28, 0
      %p202 = por %p200, %p201
      %s203 = ssub.s32 %s22, %s29
      %p204 = scmp.eq.s32.totalorder %s203, 0
      %s206 = sadd.s32 %s205, 1
      %s207 = scalar_select %p204, %s205, %s206
      %p210 = pneg %p204
      %p211 = scmp.eq.s32.totalorder %s22, 1
      %p212 = por %p210, %p211
      %p213 = scmp.ne.s32.totalorder %s205, %s208
      %p214 = scmp.eq.s32.totalorder %s22, 0
      %p215 = por %p213, %p214
      %p216 = scmp.ne.s32.totalorder %s205, %s208
      %p217 = scmp.eq.s32.totalorder %s27, 1
      %p218 = por %p216, %p217
      %p219 = scmp.ne.s32.totalorder %s208, %s209
      %p220 = scmp.eq.s32.totalorder %s27, 0
      %p221 = por %p219, %p220
      %p222 = scmp.ne.s32.totalorder %s208, %s209
      %p223 = scmp.eq.s32.totalorder %s28, 1
      %p224 = por %p222, %p223
      %p226 = scmp.ne.s32.totalorder %s209, %s225
      %p227 = scmp.eq.s32.totalorder %s28, 0
      %p228 = por %p226, %p227
      %p229 = scmp.le.s32.totalorder 1, %s22
      %p230 = scmp.lt.s32.totalorder %s22, 3
      %p231 = pnand %p229, %p230
      %p232 = pneg %p231
      // Predicated region
      $region9: #{tpu_custom_call.1} parent=5 // pred_check
        _
      $region10: #{tpu_custom_call.1} parent=5 // pred_check_branch
        %234 = sbr.rel (%p231) target = $region12
      $region11: #{tpu_custom_call.1} parent=5 // pred_region
        %s235 = ssub.s32 %s22, 1
        // Predicated region
        $region13: #{tpu_custom_call.1} parent=11 // pred_check
          %p236 = pneg %p69
        $region14: #{tpu_custom_call.1} parent=11 // pred_check_branch
          %238 = sbr.rel (%p236) target = $region16
        $region15: #{tpu_custom_call.1} parent=11 // pred_region
          _
        $region16: #{tpu_custom_call.1} parent=11 // pred_fallthru
          _
        // Predicated region
        $region17: #{tpu_custom_call.1} parent=11 // pred_check
          %p239 = pneg %p90
        $region18: #{tpu_custom_call.1} parent=11 // pred_check_branch
          %241 = sbr.rel (%p239) target = $region20
        $region19: #{tpu_custom_call.1} parent=11 // pred_region
          _
        $region20: #{tpu_custom_call.1} parent=11 // pred_fallthru
          _
        // Predicated region
        $region21: #{tpu_custom_call.1} parent=11 // pred_check
          %p242 = pneg %p111
        $region22: #{tpu_custom_call.1} parent=11 // pred_check_branch
          %244 = sbr.rel (%p242) target = $region24
        $region23: #{tpu_custom_call.1} parent=11 // pred_region
          _
        $region24: #{tpu_custom_call.1} parent=11 // pred_fallthru
          _
        // Predicated region
        $region25: #{tpu_custom_call.1} parent=11 // pred_check
          %p245 = pneg %p132
        $region26: #{tpu_custom_call.1} parent=11 // pred_check_branch
          %247 = sbr.rel (%p245) target = $region28
        $region27: #{tpu_custom_call.1} parent=11 // pred_region
          _
        $region28: #{tpu_custom_call.1} parent=11 // pred_fallthru
          _
        // Predicated region
        $region29: #{tpu_custom_call.1} parent=11 // pred_check
          %p248 = pneg %p153
        $region30: #{tpu_custom_call.1} parent=11 // pred_check_branch
          %250 = sbr.rel (%p248) target = $region32
        $region31: #{tpu_custom_call.1} parent=11 // pred_region
          _
        $region32: #{tpu_custom_call.1} parent=11 // pred_fallthru
          _
        // Predicated region
        $region33: #{tpu_custom_call.1} parent=11 // pred_check
          %p251 = pneg %p174
        $region34: #{tpu_custom_call.1} parent=11 // pred_check_branch
          %253 = sbr.rel (%p251) target = $region36
        $region35: #{tpu_custom_call.1} parent=11 // pred_region
          _
        $region36: #{tpu_custom_call.1} parent=11 // pred_fallthru
          _
        // Predicated region
        $region37: #{tpu_custom_call.1} parent=11 // pred_check
          %p254 = pneg %p195
        $region38: #{tpu_custom_call.1} parent=11 // pred_check_branch
          %256 = sbr.rel (%p254) target = $region40
        $region39: #{tpu_custom_call.1} parent=11 // pred_region
          _
        $region40: #{tpu_custom_call.1} parent=11 // pred_fallthru
          _
      $region12: #{tpu_custom_call.1} parent=5 // pred_fallthru
        _
      %p257 = scmp.lt.s32.totalorder %s22, 2
      // Predicated region
      $region41: #{tpu_custom_call.1} parent=5 // pred_check
        %p258 = pneg %p257
      $region42: #{tpu_custom_call.1} parent=5 // pred_check_branch
        %260 = sbr.rel (%p258) target = $region44
      $region43: #{tpu_custom_call.1} parent=5 // pred_region
        // Predicated region
        $region45: #{tpu_custom_call.1} parent=43 // pred_check
          %p261 = pneg %p42
        $region46: #{tpu_custom_call.1} parent=43 // pred_check_branch
          %263 = sbr.rel (%p261) target = $region48
        $region47: #{tpu_custom_call.1} parent=43 // pred_region
          %s264 = sand.u32 %s32, 1
          %s265 = scalar_lea.sflag [#allocation4], %s264
          %s266 = sand.u32 %s32, 1
          %s267 = smul.addr %s266, 64
          %s268 = scalar_lea.vmem [#allocation3], %s267
          %s270 = ssub.s32 1024, 1024
          %271 = vsyncadd %s265, %s270
          %s272 = smul.addr %s22, 8
          %s273 = smul.addr %s272, 128
          %s274 = scalar_lea.hbm %s0, %s273
          %s275 = sshll.u32 %s268, 4
          %s276 = int_to_ptr.vmem [resolvable:$true] %s275
          %281 = dma.hbm_to_vmem [thread:$0]  %s274, 1024, %s276, %s265, 256, 256, 16
        $region48: #{tpu_custom_call.1} parent=43 // pred_fallthru
          _
      $region44: #{tpu_custom_call.1} parent=5 // pred_fallthru
        _
      %p282 = scmp.le.s32.totalorder 1, %s22
      %p283 = scmp.lt.s32.totalorder %s22, 3
      %p284 = pnand %p282, %p283
      %p285 = pneg %p284
      // Predicated region
      $region49: #{tpu_custom_call.1} parent=5 // pred_check
        _
      $region50: #{tpu_custom_call.1} parent=5 // pred_check_branch
        %287 = sbr.rel (%p284) target = $region52
      $region51: #{tpu_custom_call.1} parent=5 // pred_region
        %s288 = ssub.s32 %s22, 1
        %s289 = sand.u32 %s35, 1
        %s290 = scalar_lea.sflag [#allocation4], %s289
        %s291 = sand.u32 %s35, 1
        %s292 = smul.addr %s291, 64
        %s293 = scalar_lea.vmem [#allocation3], %s292
        // Predicated region
        $region53: #{tpu_custom_call.1} parent=51 // pred_check
          %p294 = pneg %p48
        $region54: #{tpu_custom_call.1} parent=51 // pred_check_branch
          %296 = sbr.rel (%p294) target = $region56
        $region55: #{tpu_custom_call.1} parent=51 // pred_region
          %297 = dma.done %s290, 1024
        $region56: #{tpu_custom_call.1} parent=51 // pred_fallthru
          _
        %s298 = sand.u32 %s35, 1
        %s299 = scalar_lea.sflag [#allocation4], %s298
        %s300 = sand.u32 %s35, 1
        %s301 = smul.addr %s300, 64
        %s302 = scalar_lea.vmem [#allocation3], %s301
        %p303 = pneg %p48
        %p304 = pneg %p45
        %p305 = pneg %p69
        %p306 = pneg %p66
        %p307 = pneg %p90
        %p308 = pneg %p87
        %p309 = pneg %p111
        %p310 = pneg %p108
        %p311 = pneg %p132
        %p312 = pneg %p129
        %p313 = pneg %p153
        %p314 = pneg %p150
        %p315 = pneg %p174
        %p316 = pneg %p171
        %p317 = pneg %p195
        %p318 = pneg %p192
        %p319 = pneg %p221
        %p320 = pneg %p218
        %s321 = sand.u32 %s208, 1
        %s322 = scalar_lea.sflag [#allocation5], %s321
        %s323 = sand.u32 %s208, 1
        %s324 = smul.addr %s323, 64
        %s325 = scalar_lea.vmem [#allocation6], %s324
        %v327 = vld [vmem:[%s293] sm:$0xff]
        %v328 = vld [vmem:[%s293 + $0x8] sm:$0xff]
        %v329 = vld [vmem:[%s293 + $0x10] sm:$0xff]
        %v330 = vld [vmem:[%s293 + $0x18] sm:$0xff]
        %v331 = vld [vmem:[%s293 + $0x20] sm:$0xff]
        %v332 = vld [vmem:[%s293 + $0x28] sm:$0xff]
        %v333 = vld [vmem:[%s293 + $0x30] sm:$0xff]
        %v334 = vld [vmem:[%s293 + $0x38] sm:$0xff]
        %v335 = vpack.c.bf16 %v329, %v327
        %v336 = vpack.c.bf16 %v330, %v328
        %v337 = vpack.c.bf16 %v333, %v331
        %v338 = vpack.c.bf16 %v334, %v332
        %v339 = vld [vmem:[%s1] sm:$0x3]
        %v340 = vld [vmem:[%s2] sm:$0xf]
        %342 = vset.pattern.permute.xlu0 0
        %343 = vperm.xlu0 %342, %v340
        %v344 = vpop.permute.xlu0 %343
        %vm346 = vcmask 261120
        %v348 = vsel %vm346, %v339, 0
        %350 = vmatprep.subr.bf16.mxu0 0
        %351 = vmatpush1.bf16.msra.mxu0 0
        %352 = vmatprep.subr.bf16.mxu0 0
        %353 = vmatpush1.bf16.msra.mxu0 0
        %354 = vmatprep.subr.bf16.mxu0 0
        %355 = vmatpush1.bf16.msra.mxu0 0
        %356 = vmatprep.subr.bf16.mxu0 0
        %357 = vmatpush1.bf16.msra.mxu0 0
        %358 = vmatprep.subr.bf16.mxu0 0
        %359 = vmatpush1.bf16.msra.mxu0 0
        %360 = vmatprep.subr.bf16.mxu0 0
        %361 = vmatpush1.bf16.msra.mxu0 0
        %362 = vmatprep.subr.bf16.mxu0 %v338
        %363 = vmatpush1.bf16.msra.mxu0 %v337
        %364 = vmatprep.subr.bf16.mxu0 %v336
        %365 = vmatpush1.bf16.msra.mxu0 %v335
        %366 = vmatprep.subr.bf16.mxu0 0
        %367 = vmatpush2.bf16.msra.mxu0 0
        %368 = vmatprep.subr.bf16.mxu0 0
        %369 = vmatpush2.bf16.msra.mxu0 0
        %370 = vmatprep.subr.bf16.mxu0 0
        %371 = vmatpush2.bf16.msra.mxu0 0
        %372 = vmatprep.subr.bf16.mxu0 0
        %373 = vmatpush2.bf16.msra.mxu0 0
        %374 = vmatprep.subr.bf16.mxu0 0
        %375 = vmatpush2.bf16.msra.mxu0 0
        %376 = vmatprep.subr.bf16.mxu0 0
        %377 = vmatpush2.bf16.msra.mxu0 0
        %378 = vmatprep.subr.bf16.mxu0 0
        %379 = vmatpush2.bf16.msra.mxu0 0
        %380 = vmatprep.subr.bf16.mxu0 0
        %381 = vmatpush2.bf16.msra.mxu0 0
        %382 = vmatprep.mubr.bf16.mxu0 0
        %383 = vmatmul.mubr.bf16.gmra.mxu0 %v348
        %v384 = vpop.f32.mrf.mxu0
        %v385 = vadd.f32 %v344, %v384
        %v386 = vpop.f32.mrf.mxu0
        %v387 = vadd.f32 %v344, %v386
        %v388 = vpop.f32.mrf.mxu0
        %v389 = vpop.f32.mrf.mxu0
        %390 = vdwg.mxu0
        %v391 = vld [vmem:[%s3] sm:$0x3]
        %v392 = vld [vmem:[%s4] sm:$0xf]
        %394 = vset.pattern.permute.xlu0 0
        %395 = vperm.xlu0 %394, %v392
        %v396 = vpop.permute.xlu0 %395
        %v399 = vsel %vm346, %v391, 0
        %401 = vmatprep.subr.bf16.mxu0 0
        %402 = vmatpush1.bf16.msra.mxu0 0
        %403 = vmatprep.subr.bf16.mxu0 0
        %404 = vmatpush1.bf16.msra.mxu0 0
        %405 = vmatprep.subr.bf16.mxu0 0
        %406 = vmatpush1.bf16.msra.mxu0 0
        %407 = vmatprep.subr.bf16.mxu0 0
        %408 = vmatpush1.bf16.msra.mxu0 0
        %409 = vmatprep.subr.bf16.mxu0 0
        %410 = vmatpush1.bf16.msra.mxu0 0
        %411 = vmatprep.subr.bf16.mxu0 0
        %412 = vmatpush1.bf16.msra.mxu0 0
        %413 = vmatprep.subr.bf16.mxu0 %v338
        %414 = vmatpush1.bf16.msra.mxu0 %v337
        %415 = vmatprep.subr.bf16.mxu0 %v336
        %416 = vmatpush1.bf16.msra.mxu0 %v335
        %417 = vmatprep.subr.bf16.mxu0 0
        %418 = vmatpush2.bf16.msra.mxu0 0
        %419 = vmatprep.subr.bf16.mxu0 0
        %420 = vmatpush2.bf16.msra.mxu0 0
        %421 = vmatprep.subr.bf16.mxu0 0
        %422 = vmatpush2.bf16.msra.mxu0 0
        %423 = vmatprep.subr.bf16.mxu0 0
        %424 = vmatpush2.bf16.msra.mxu0 0
        %425 = vmatprep.subr.bf16.mxu0 0
        %426 = vmatpush2.bf16.msra.mxu0 0
        %427 = vmatprep.subr.bf16.mxu0 0
        %428 = vmatpush2.bf16.msra.mxu0 0
        %429 = vmatprep.subr.bf16.mxu0 0
        %430 = vmatpush2.bf16.msra.mxu0 0
        %431 = vmatprep.subr.bf16.mxu0 0
        %432 = vmatpush2.bf16.msra.mxu0 0
        %433 = vmatprep.mubr.bf16.mxu0 0
        %434 = vmatmul.mubr.bf16.gmra.mxu0 %v399
        %v435 = vpop.f32.mrf.mxu0
        %v436 = vadd.f32 %v396, %v435
        %v437 = vpop.f32.mrf.mxu0
        %v438 = vadd.f32 %v396, %v437
        %v439 = vpop.f32.mrf.mxu0
        %v440 = vpop.f32.mrf.mxu0
        %441 = vdwg.mxu0
        %v442 = vld [vmem:[%s5] sm:$0xf]
        %v443 = vld [vmem:[%s5 + $0x4] sm:$0xf]
        %v444 = vld [vmem:[%s5 + $0x8] sm:$0xf]
        %v445 = vld [vmem:[%s5 + $0xc] sm:$0xf]
        %v446 = vld [vmem:[%s6] sm:$0xff]
        %v447 = vld [vmem:[%s6 + $0x8] sm:$0xff]
        %v448 = vld [vmem:[%s6 + $0x10] sm:$0xff]
        %v449 = vld [vmem:[%s6 + $0x18] sm:$0xff]
        %451 = vset.pattern.permute.xlu0 0
        %452 = vperm.xlu0 %451, %v446
        %v453 = vpop.permute.xlu0 %452
        %456 = vset.pattern.permute.xlu0 0
        %457 = vperm.xlu0 %456, %v447
        %v458 = vpop.permute.xlu0 %457
        %461 = vset.pattern.permute.xlu0 0
        %462 = vperm.xlu0 %461, %v448
        %v463 = vpop.permute.xlu0 %462
        %466 = vset.pattern.permute.xlu0 0
        %467 = vperm.xlu0 %466, %v449
        %v468 = vpop.permute.xlu0 %467
        %v474 = vunpack.c.l.b16 %v442
        %v475 = vunpack.c.l.b16 %v443
        %v476 = vunpack.c.l.b16 %v444
        %v477 = vunpack.c.l.b16 %v445
        %v478 = vpack.c.b16 %v475, %v474
        %v479 = vpack.c.b16 %v477, %v476
        %v481 = vsel %vm346, %v478, 0
        %v484 = vsel %vm346, %v479, 0
        %486 = vmatprep.subr.bf16.mxu0 0
        %487 = vmatpush1.bf16.msra.mxu0 0
        %488 = vmatprep.subr.bf16.mxu0 0
        %489 = vmatpush1.bf16.msra.mxu0 0
        %490 = vmatprep.subr.bf16.mxu0 0
        %491 = vmatpush1.bf16.msra.mxu0 0
        %492 = vmatprep.subr.bf16.mxu0 0
        %493 = vmatpush1.bf16.msra.mxu0 0
        %494 = vmatprep.subr.bf16.mxu0 0
        %495 = vmatpush1.bf16.msra.mxu0 0
        %496 = vmatprep.subr.bf16.mxu0 0
        %497 = vmatpush1.bf16.msra.mxu0 0
        %498 = vmatprep.subr.bf16.mxu0 %v338
        %499 = vmatpush1.bf16.msra.mxu0 %v337
        %500 = vmatprep.subr.bf16.mxu0 %v336
        %501 = vmatpush1.bf16.msra.mxu0 %v335
        %502 = vmatprep.subr.bf16.mxu0 0
        %503 = vmatpush2.bf16.msra.mxu0 0
        %504 = vmatprep.subr.bf16.mxu0 0
        %505 = vmatpush2.bf16.msra.mxu0 0
        %506 = vmatprep.subr.bf16.mxu0 0
        %507 = vmatpush2.bf16.msra.mxu0 0
        %508 = vmatprep.subr.bf16.mxu0 0
        %509 = vmatpush2.bf16.msra.mxu0 0
        %510 = vmatprep.subr.bf16.mxu0 0
        %511 = vmatpush2.bf16.msra.mxu0 0
        %512 = vmatprep.subr.bf16.mxu0 0
        %513 = vmatpush2.bf16.msra.mxu0 0
        %514 = vmatprep.subr.bf16.mxu0 0
        %515 = vmatpush2.bf16.msra.mxu0 0
        %516 = vmatprep.subr.bf16.mxu0 0
        %517 = vmatpush2.bf16.msra.mxu0 0
        %518 = vmatprep.mubr.bf16.mxu0 0
        %519 = vmatmul.mubr.bf16.gmra.mxu0 %v481
        %v520 = vpop.f32.mrf.mxu0
        %v521 = vadd.f32 %v453, %v520
        %v522 = vpop.f32.mrf.mxu0
        %v523 = vadd.f32 %v453, %v522
        %v524 = vpop.f32.mrf.mxu0
        %v525 = vadd.f32 %v458, %v524
        %v526 = vpop.f32.mrf.mxu0
        %v527 = vadd.f32 %v458, %v526
        %528 = vmatprep.mubr.bf16.mxu0 0
        %529 = vmatmul.mubr.bf16.gmra.mxu0 %v484
        %v530 = vpop.f32.mrf.mxu0
        %v531 = vadd.f32 %v463, %v530
        %v532 = vpop.f32.mrf.mxu0
        %v533 = vadd.f32 %v463, %v532
        %v534 = vpop.f32.mrf.mxu0
        %v535 = vadd.f32 %v468, %v534
        %v536 = vpop.f32.mrf.mxu0
        %v537 = vadd.f32 %v468, %v536
        %538 = vdwg.mxu0
        %v539 = vpack.c.bf16 %v385, %v385
        %v540 = vpack.c.bf16 %v387, %v387
        %v541 = vpack.c.bf16 %v436, %v436
        %v542 = vpack.c.bf16 %v438, %v438
        %543 = vxpose.xlu0.c.b16.start [1/8] %v539, 128
        %544 = vxpose.xlu0.c.b16.cont [2/8] 0, 128
        %545 = vxpose.xlu0.c.b16.cont [3/8] 0, 128
        %546 = vxpose.xlu0.c.b16.cont [4/8] 0, 128
        %547 = vxpose.xlu0.c.b16.cont [5/8] 0, 128
        %548 = vxpose.xlu0.c.b16.cont [6/8] 0, 128
        %549 = vxpose.xlu0.c.b16.cont [7/8] 0, 128
        %550 = vxpose.xlu0.c.b16.end [8/8] 0, 128
        %v551 = vpop.trf.xlu0
        %v552 = vpop.trf.xlu0
        %v553 = vpop.trf.xlu0
        %v554 = vpop.trf.xlu0
        %v555 = vpop.trf.xlu0
        %v556 = vpop.trf.xlu0
        %v557 = vpop.trf.xlu0
        %v558 = vpop.trf.xlu0
        %559 = vxpose.xlu0.c.b16.start [1/8] %v540, 128
        %560 = vxpose.xlu0.c.b16.cont [2/8] 0, 128
        %561 = vxpose.xlu0.c.b16.cont [3/8] 0, 128
        %562 = vxpose.xlu0.c.b16.cont [4/8] 0, 128
        %563 = vxpose.xlu0.c.b16.cont [5/8] 0, 128
        %564 = vxpose.xlu0.c.b16.cont [6/8] 0, 128
        %565 = vxpose.xlu0.c.b16.cont [7/8] 0, 128
        %566 = vxpose.xlu0.c.b16.end [8/8] 0, 128
        %v567 = vpop.trf.xlu0
        %v568 = vpop.trf.xlu0
        %v569 = vpop.trf.xlu0
        %v570 = vpop.trf.xlu0
        %v571 = vpop.trf.xlu0
        %v572 = vpop.trf.xlu0
        %v573 = vpop.trf.xlu0
        %v574 = vpop.trf.xlu0
        %vm575 = vcmask 31744
        %v577 = vsel %vm575, %v551, 0
        %v580 = vsel %vm575, %v552, 0
        %v583 = vsel %vm575, %v553, 0
        %v586 = vsel %vm575, %v554, 0
        %v589 = vsel %vm575, %v555, 0
        %v592 = vsel %vm575, %v556, 0
        %v595 = vsel %vm575, %v557, 0
        %v598 = vsel %vm575, %v558, 0
        %v601 = vsel %vm575, %v567, 0
        %v604 = vsel %vm575, %v568, 0
        %v607 = vsel %vm575, %v569, 0
        %v610 = vsel %vm575, %v570, 0
        %v613 = vsel %vm575, %v571, 0
        %v616 = vsel %vm575, %v572, 0
        %v619 = vsel %vm575, %v573, 0
        %v622 = vsel %vm575, %v574, 0
        %vm624 = vcmask 1041408
        %v626 = vsel %vm624, %v541, 0
        %v629 = vsel %vm624, %v542, 0
        %631 = vmatprep.subr.bf16.mxu0 0
        %632 = vmatpush1.bf16.msra.mxu0 0
        %633 = vmatprep.subr.bf16.mxu0 0
        %634 = vmatpush1.bf16.msra.mxu0 0
        %635 = vmatprep.subr.bf16.mxu0 0
        %636 = vmatpush1.bf16.msra.mxu0 0
        %637 = vmatprep.subr.bf16.mxu0 0
        %638 = vmatpush1.bf16.msra.mxu0 0
        %639 = vmatprep.subr.bf16.mxu0 0
        %640 = vmatpush1.bf16.msra.mxu0 0
        %641 = vmatprep.subr.bf16.mxu0 0
        %642 = vmatpush1.bf16.msra.mxu0 0
        %643 = vmatprep.subr.bf16.mxu0 0
        %644 = vmatpush1.bf16.msra.mxu0 0
        %645 = vmatprep.subr.bf16.mxu0 %v629
        %646 = vmatpush1.bf16.msra.mxu0 %v626
        %647 = vmatprep.subr.bf16.mxu0 0
        %648 = vmatpush2.bf16.msra.mxu0 0
        %649 = vmatprep.subr.bf16.mxu0 0
        %650 = vmatpush2.bf16.msra.mxu0 0
        %651 = vmatprep.subr.bf16.mxu0 0
        %652 = vmatpush2.bf16.msra.mxu0 0
        %653 = vmatprep.subr.bf16.mxu0 0
        %654 = vmatpush2.bf16.msra.mxu0 0
        %655 = vmatprep.subr.bf16.mxu0 0
        %656 = vmatpush2.bf16.msra.mxu0 0
        %657 = vmatprep.subr.bf16.mxu0 0
        %658 = vmatpush2.bf16.msra.mxu0 0
        %659 = vmatprep.subr.bf16.mxu0 0
        %660 = vmatpush2.bf16.msra.mxu0 0
        %661 = vmatprep.subr.bf16.mxu0 0
        %662 = vmatpush2.bf16.msra.mxu0 0
        %663 = vmatprep.mubr.bf16.mxu0 0
        %664 = vmatmul.mubr.bf16.gmra.mxu0 %v577
        %v665 = vpop.f32.mrf.mxu0
        %v666 = vadd.f32 0.0, %v665
        %v667 = vpop.f32.mrf.mxu0
        %v668 = vadd.f32 0.0, %v667
        %v669 = vpop.f32.mrf.mxu0
        %v670 = vadd.f32 0.0, %v669
        %v671 = vpop.f32.mrf.mxu0
        %v672 = vadd.f32 0.0, %v671
        %673 = vmatprep.mubr.bf16.mxu0 0
        %674 = vmatmul.mubr.bf16.gmra.mxu0 %v580
        %v675 = vpop.f32.mrf.mxu0
        %v676 = vadd.f32 0.0, %v675
        %v677 = vpop.f32.mrf.mxu0
        %v678 = vadd.f32 0.0, %v677
        %v679 = vpop.f32.mrf.mxu0
        %v680 = vadd.f32 0.0, %v679
        %v681 = vpop.f32.mrf.mxu0
        %v682 = vadd.f32 0.0, %v681
        %683 = vmatprep.mubr.bf16.mxu0 0
        %684 = vmatmul.mubr.bf16.gmra.mxu0 %v583
        %v685 = vpop.f32.mrf.mxu0
        %v686 = vadd.f32 0.0, %v685
        %v687 = vpop.f32.mrf.mxu0
        %v688 = vadd.f32 0.0, %v687
        %v689 = vpop.f32.mrf.mxu0
        %v690 = vadd.f32 0.0, %v689
        %v691 = vpop.f32.mrf.mxu0
        %v692 = vadd.f32 0.0, %v691
        %693 = vmatprep.mubr.bf16.mxu0 0
        %694 = vmatmul.mubr.bf16.gmra.mxu0 %v586
        %v695 = vpop.f32.mrf.mxu0
        %v696 = vadd.f32 0.0, %v695
        %v697 = vpop.f32.mrf.mxu0
        %v698 = vadd.f32 0.0, %v697
        %v699 = vpop.f32.mrf.mxu0
        %v700 = vadd.f32 0.0, %v699
        %v701 = vpop.f32.mrf.mxu0
        %v702 = vadd.f32 0.0, %v701
        %703 = vmatprep.mubr.bf16.mxu0 0
        %704 = vmatmul.mubr.bf16.gmra.mxu0 %v589
        %v705 = vpop.f32.mrf.mxu0
        %v706 = vadd.f32 0.0, %v705
        %v707 = vpop.f32.mrf.mxu0
        %v708 = vadd.f32 0.0, %v707
        %v709 = vpop.f32.mrf.mxu0
        %v710 = vadd.f32 0.0, %v709
        %v711 = vpop.f32.mrf.mxu0
        %v712 = vadd.f32 0.0, %v711
        %713 = vmatprep.mubr.bf16.mxu0 0
        %714 = vmatmul.mubr.bf16.gmra.mxu0 %v592
        %v715 = vpop.f32.mrf.mxu0
        %v716 = vadd.f32 0.0, %v715
        %v717 = vpop.f32.mrf.mxu0
        %v718 = vadd.f32 0.0, %v717
        %v719 = vpop.f32.mrf.mxu0
        %v720 = vadd.f32 0.0, %v719
        %v721 = vpop.f32.mrf.mxu0
        %v722 = vadd.f32 0.0, %v721
        %723 = vmatprep.mubr.bf16.mxu0 0
        %724 = vmatmul.mubr.bf16.gmra.mxu0 %v595
        %v725 = vpop.f32.mrf.mxu0
        %v726 = vadd.f32 0.0, %v725
        %v727 = vpop.f32.mrf.mxu0
        %v728 = vadd.f32 0.0, %v727
        %v729 = vpop.f32.mrf.mxu0
        %v730 = vadd.f32 0.0, %v729
        %v731 = vpop.f32.mrf.mxu0
        %v732 = vadd.f32 0.0, %v731
        %733 = vmatprep.mubr.bf16.mxu0 0
        %734 = vmatmul.mubr.bf16.gmra.mxu0 %v598
        %v735 = vpop.f32.mrf.mxu0
        %v736 = vadd.f32 0.0, %v735
        %v737 = vpop.f32.mrf.mxu0
        %v738 = vadd.f32 0.0, %v737
        %v739 = vpop.f32.mrf.mxu0
        %v740 = vadd.f32 0.0, %v739
        %v741 = vpop.f32.mrf.mxu0
        %v742 = vadd.f32 0.0, %v741
        %743 = vmatprep.mubr.bf16.mxu0 0
        %744 = vmatmul.mubr.bf16.gmra.mxu0 %v601
        %v745 = vpop.f32.mrf.mxu0
        %v746 = vadd.f32 0.0, %v745
        %v747 = vpop.f32.mrf.mxu0
        %v748 = vadd.f32 0.0, %v747
        %v749 = vpop.f32.mrf.mxu0
        %v750 = vadd.f32 0.0, %v749
        %v751 = vpop.f32.mrf.mxu0
        %v752 = vadd.f32 0.0, %v751
        %753 = vmatprep.mubr.bf16.mxu0 0
        %754 = vmatmul.mubr.bf16.gmra.mxu0 %v604
        %v755 = vpop.f32.mrf.mxu0
        %v756 = vadd.f32 0.0, %v755
        %v757 = vpop.f32.mrf.mxu0
        %v758 = vadd.f32 0.0, %v757
        %v759 = vpop.f32.mrf.mxu0
        %v760 = vadd.f32 0.0, %v759
        %v761 = vpop.f32.mrf.mxu0
        %v762 = vadd.f32 0.0, %v761
        %763 = vmatprep.mubr.bf16.mxu0 0
        %764 = vmatmul.mubr.bf16.gmra.mxu0 %v607
        %v765 = vpop.f32.mrf.mxu0
        %v766 = vadd.f32 0.0, %v765
        %v767 = vpop.f32.mrf.mxu0
        %v768 = vadd.f32 0.0, %v767
        %v769 = vpop.f32.mrf.mxu0
        %v770 = vadd.f32 0.0, %v769
        %v771 = vpop.f32.mrf.mxu0
        %v772 = vadd.f32 0.0, %v771
        %773 = vmatprep.mubr.bf16.mxu0 0
        %774 = vmatmul.mubr.bf16.gmra.mxu0 %v610
        %v775 = vpop.f32.mrf.mxu0
        %v776 = vadd.f32 0.0, %v775
        %v777 = vpop.f32.mrf.mxu0
        %v778 = vadd.f32 0.0, %v777
        %v779 = vpop.f32.mrf.mxu0
        %v780 = vadd.f32 0.0, %v779
        %v781 = vpop.f32.mrf.mxu0
        %v782 = vadd.f32 0.0, %v781
        %783 = vmatprep.mubr.bf16.mxu0 0
        %784 = vmatmul.mubr.bf16.gmra.mxu0 %v613
        %v785 = vpop.f32.mrf.mxu0
        %v786 = vadd.f32 0.0, %v785
        %v787 = vpop.f32.mrf.mxu0
        %v788 = vadd.f32 0.0, %v787
        %v789 = vpop.f32.mrf.mxu0
        %v790 = vadd.f32 0.0, %v789
        %v791 = vpop.f32.mrf.mxu0
        %v792 = vadd.f32 0.0, %v791
        %793 = vmatprep.mubr.bf16.mxu0 0
        %794 = vmatmul.mubr.bf16.gmra.mxu0 %v616
        %v795 = vpop.f32.mrf.mxu0
        %v796 = vadd.f32 0.0, %v795
        %v797 = vpop.f32.mrf.mxu0
        %v798 = vadd.f32 0.0, %v797
        %v799 = vpop.f32.mrf.mxu0
        %v800 = vadd.f32 0.0, %v799
        %v801 = vpop.f32.mrf.mxu0
        %v802 = vadd.f32 0.0, %v801
        %803 = vmatprep.mubr.bf16.mxu0 0
        %804 = vmatmul.mubr.bf16.gmra.mxu0 %v619
        %v805 = vpop.f32.mrf.mxu0
        %v806 = vadd.f32 0.0, %v805
        %v807 = vpop.f32.mrf.mxu0
        %v808 = vadd.f32 0.0, %v807
        %v809 = vpop.f32.mrf.mxu0
        %v810 = vadd.f32 0.0, %v809
        %v811 = vpop.f32.mrf.mxu0
        %v812 = vadd.f32 0.0, %v811
        %813 = vmatprep.mubr.bf16.mxu0 0
        %814 = vmatmul.mubr.bf16.gmra.mxu0 %v622
        %v815 = vpop.f32.mrf.mxu0
        %v816 = vadd.f32 0.0, %v815
        %v817 = vpop.f32.mrf.mxu0
        %v818 = vadd.f32 0.0, %v817
        %v819 = vpop.f32.mrf.mxu0
        %v820 = vadd.f32 0.0, %v819
        %v821 = vpop.f32.mrf.mxu0
        %v822 = vadd.f32 0.0, %v821
        %823 = vdwg.mxu0
        %v824 = vmax.f32 %v666, %v668
        %825 = vmax.xlane.f32.xlu0 %v824
        %v826 = vpop.xlane.xlu0 %825
        %v827 = vmax.f32 %v670, %v672
        %828 = vmax.xlane.f32.xlu0 %v827
        %v829 = vpop.xlane.xlu0 %828
        %v830 = vmax.f32 %v676, %v678
        %831 = vmax.xlane.f32.xlu0 %v830
        %v832 = vpop.xlane.xlu0 %831
        %v833 = vmax.f32 %v680, %v682
        %834 = vmax.xlane.f32.xlu0 %v833
        %v835 = vpop.xlane.xlu0 %834
        %v836 = vmax.f32 %v686, %v688
        %837 = vmax.xlane.f32.xlu0 %v836
        %v838 = vpop.xlane.xlu0 %837
        %v839 = vmax.f32 %v690, %v692
        %840 = vmax.xlane.f32.xlu0 %v839
        %v841 = vpop.xlane.xlu0 %840
        %v842 = vmax.f32 %v696, %v698
        %843 = vmax.xlane.f32.xlu0 %v842
        %v844 = vpop.xlane.xlu0 %843
        %v845 = vmax.f32 %v700, %v702
        %846 = vmax.xlane.f32.xlu0 %v845
        %v847 = vpop.xlane.xlu0 %846
        %v848 = vmax.f32 %v706, %v708
        %849 = vmax.xlane.f32.xlu0 %v848
        %v850 = vpop.xlane.xlu0 %849
        %v851 = vmax.f32 %v710, %v712
        %852 = vmax.xlane.f32.xlu0 %v851
        %v853 = vpop.xlane.xlu0 %852
        %v854 = vmax.f32 %v716, %v718
        %855 = vmax.xlane.f32.xlu0 %v854
        %v856 = vpop.xlane.xlu0 %855
        %v857 = vmax.f32 %v720, %v722
        %858 = vmax.xlane.f32.xlu0 %v857
        %v859 = vpop.xlane.xlu0 %858
        %v860 = vmax.f32 %v726, %v728
        %861 = vmax.xlane.f32.xlu0 %v860
        %v862 = vpop.xlane.xlu0 %861
        %v863 = vmax.f32 %v730, %v732
        %864 = vmax.xlane.f32.xlu0 %v863
        %v865 = vpop.xlane.xlu0 %864
        %v866 = vmax.f32 %v736, %v738
        %867 = vmax.xlane.f32.xlu0 %v866
        %v868 = vpop.xlane.xlu0 %867
        %v869 = vmax.f32 %v740, %v742
        %870 = vmax.xlane.f32.xlu0 %v869
        %v871 = vpop.xlane.xlu0 %870
        %v872 = vmax.f32 %v746, %v748
        %873 = vmax.xlane.f32.xlu0 %v872
        %v874 = vpop.xlane.xlu0 %873
        %v875 = vmax.f32 %v750, %v752
        %876 = vmax.xlane.f32.xlu0 %v875
        %v877 = vpop.xlane.xlu0 %876
        %v878 = vmax.f32 %v756, %v758
        %879 = vmax.xlane.f32.xlu0 %v878
        %v880 = vpop.xlane.xlu0 %879
        %v881 = vmax.f32 %v760, %v762
        %882 = vmax.xlane.f32.xlu0 %v881
        %v883 = vpop.xlane.xlu0 %882
        %v884 = vmax.f32 %v766, %v768
        %885 = vmax.xlane.f32.xlu0 %v884
        %v886 = vpop.xlane.xlu0 %885
        %v887 = vmax.f32 %v770, %v772
        %888 = vmax.xlane.f32.xlu0 %v887
        %v889 = vpop.xlane.xlu0 %888
        %v890 = vmax.f32 %v776, %v778
        %891 = vmax.xlane.f32.xlu0 %v890
        %v892 = vpop.xlane.xlu0 %891
        %v893 = vmax.f32 %v780, %v782
        %894 = vmax.xlane.f32.xlu0 %v893
        %v895 = vpop.xlane.xlu0 %894
        %v896 = vmax.f32 %v786, %v788
        %897 = vmax.xlane.f32.xlu0 %v896
        %v898 = vpop.xlane.xlu0 %897
        %v899 = vmax.f32 %v790, %v792
        %900 = vmax.xlane.f32.xlu0 %v899
        %v901 = vpop.xlane.xlu0 %900
        %v902 = vmax.f32 %v796, %v798
        %903 = vmax.xlane.f32.xlu0 %v902
        %v904 = vpop.xlane.xlu0 %903
        %v905 = vmax.f32 %v800, %v802
        %906 = vmax.xlane.f32.xlu0 %v905
        %v907 = vpop.xlane.xlu0 %906
        %v908 = vmax.f32 %v806, %v808
        %909 = vmax.xlane.f32.xlu0 %v908
        %v910 = vpop.xlane.xlu0 %909
        %v911 = vmax.f32 %v810, %v812
        %912 = vmax.xlane.f32.xlu0 %v911
        %v913 = vpop.xlane.xlu0 %912
        %v914 = vmax.f32 %v816, %v818
        %915 = vmax.xlane.f32.xlu0 %v914
        %v916 = vpop.xlane.xlu0 %915
        %v917 = vmax.f32 %v820, %v822
        %918 = vmax.xlane.f32.xlu0 %v917
        %v919 = vpop.xlane.xlu0 %918
        %v920 = vsub.f32 %v666, %v826
        %v921 = vsub.f32 %v668, %v826
        %v922 = vsub.f32 %v670, %v829
        %v923 = vsub.f32 %v672, %v829
        %v924 = vsub.f32 %v676, %v832
        %v925 = vsub.f32 %v678, %v832
        %v926 = vsub.f32 %v680, %v835
        %v927 = vsub.f32 %v682, %v835
        %v928 = vsub.f32 %v686, %v838
        %v929 = vsub.f32 %v688, %v838
        %v930 = vsub.f32 %v690, %v841
        %v931 = vsub.f32 %v692, %v841
        %v932 = vsub.f32 %v696, %v844
        %v933 = vsub.f32 %v698, %v844
        %v934 = vsub.f32 %v700, %v847
        %v935 = vsub.f32 %v702, %v847
        %v936 = vsub.f32 %v706, %v850
        %v937 = vsub.f32 %v708, %v850
        %v938 = vsub.f32 %v710, %v853
        %v939 = vsub.f32 %v712, %v853
        %v940 = vsub.f32 %v716, %v856
        %v941 = vsub.f32 %v718, %v856
        %v942 = vsub.f32 %v720, %v859
        %v943 = vsub.f32 %v722, %v859
        %v944 = vsub.f32 %v726, %v862
        %v945 = vsub.f32 %v728, %v862
        %v946 = vsub.f32 %v730, %v865
        %v947 = vsub.f32 %v732, %v865
        %v948 = vsub.f32 %v736, %v868
        %v949 = vsub.f32 %v738, %v868
        %v950 = vsub.f32 %v740, %v871
        %v951 = vsub.f32 %v742, %v871
        %v952 = vsub.f32 %v746, %v874
        %v953 = vsub.f32 %v748, %v874
        %v954 = vsub.f32 %v750, %v877
        %v955 = vsub.f32 %v752, %v877
        %v956 = vsub.f32 %v756, %v880
        %v957 = vsub.f32 %v758, %v880
        %v958 = vsub.f32 %v760, %v883
        %v959 = vsub.f32 %v762, %v883
        %v960 = vsub.f32 %v766, %v886
        %v961 = vsub.f32 %v768, %v886
        %v962 = vsub.f32 %v770, %v889
        %v963 = vsub.f32 %v772, %v889
        %v964 = vsub.f32 %v776, %v892
        %v965 = vsub.f32 %v778, %v892
        %v966 = vsub.f32 %v780, %v895
        %v967 = vsub.f32 %v782, %v895
        %v968 = vsub.f32 %v786, %v898
        %v969 = vsub.f32 %v788, %v898
        %v970 = vsub.f32 %v790, %v901
        %v971 = vsub.f32 %v792, %v901
        %v972 = vsub.f32 %v796, %v904
        %v973 = vsub.f32 %v798, %v904
        %v974 = vsub.f32 %v800, %v907
        %v975 = vsub.f32 %v802, %v907
        %v976 = vsub.f32 %v806, %v910
        %v977 = vsub.f32 %v808, %v910
        %v978 = vsub.f32 %v810, %v913
        %v979 = vsub.f32 %v812, %v913
        %v980 = vsub.f32 %v816, %v916
        %v981 = vsub.f32 %v818, %v916
        %v982 = vsub.f32 %v820, %v919
        %v983 = vsub.f32 %v822, %v919
        %v984 = vmul.f32 %v920, 1.442695
        %v985 = vpow.pop %v984
        %v986 = vmul.f32 %v921, 1.442695
        %v987 = vpow.pop %v986
        %v988 = vmul.f32 %v922, 1.442695
        %v989 = vpow.pop %v988
        %v990 = vmul.f32 %v923, 1.442695
        %v991 = vpow.pop %v990
        %v992 = vmul.f32 %v924, 1.442695
        %v993 = vpow.pop %v992
        %v994 = vmul.f32 %v925, 1.442695
        %v995 = vpow.pop %v994
        %v996 = vmul.f32 %v926, 1.442695
        %v997 = vpow.pop %v996
        %v998 = vmul.f32 %v927, 1.442695
        %v999 = vpow.pop %v998
        %v1000 = vmul.f32 %v928, 1.442695
        %v1001 = vpow.pop %v1000
        %v1002 = vmul.f32 %v929, 1.442695
        %v1003 = vpow.pop %v1002
        %v1004 = vmul.f32 %v930, 1.442695
        %v1005 = vpow.pop %v1004
        %v1006 = vmul.f32 %v931, 1.442695
        %v1007 = vpow.pop %v1006
        %v1008 = vmul.f32 %v932, 1.442695
        %v1009 = vpow.pop %v1008
        %v1010 = vmul.f32 %v933, 1.442695
        %v1011 = vpow.pop %v1010
        %v1012 = vmul.f32 %v934, 1.442695
        %v1013 = vpow.pop %v1012
        %v1014 = vmul.f32 %v935, 1.442695
        %v1015 = vpow.pop %v1014
        %v1016 = vmul.f32 %v936, 1.442695
        %v1017 = vpow.pop %v1016
        %v1018 = vmul.f32 %v937, 1.442695
        %v1019 = vpow.pop %v1018
        %v1020 = vmul.f32 %v938, 1.442695
        %v1021 = vpow.pop %v1020
        %v1022 = vmul.f32 %v939, 1.442695
        %v1023 = vpow.pop %v1022
        %v1024 = vmul.f32 %v940, 1.442695
        %v1025 = vpow.pop %v1024
        %v1026 = vmul.f32 %v941, 1.442695
        %v1027 = vpow.pop %v1026
        %v1028 = vmul.f32 %v942, 1.442695
        %v1029 = vpow.pop %v1028
        %v1030 = vmul.f32 %v943, 1.442695
        %v1031 = vpow.pop %v1030
        %v1032 = vmul.f32 %v944, 1.442695
        %v1033 = vpow.pop %v1032
        %v1034 = vmul.f32 %v945, 1.442695
        %v1035 = vpow.pop %v1034
        %v1036 = vmul.f32 %v946, 1.442695
        %v1037 = vpow.pop %v1036
        %v1038 = vmul.f32 %v947, 1.442695
        %v1039 = vpow.pop %v1038
        %v1040 = vmul.f32 %v948, 1.442695
        %v1041 = vpow.pop %v1040
        %v1042 = vmul.f32 %v949, 1.442695
        %v1043 = vpow.pop %v1042
        %v1044 = vmul.f32 %v950, 1.442695
        %v1045 = vpow.pop %v1044
        %v1046 = vmul.f32 %v951, 1.442695
        %v1047 = vpow.pop %v1046
        %v1048 = vmul.f32 %v952, 1.442695
        %v1049 = vpow.pop %v1048
        %v1050 = vmul.f32 %v953, 1.442695
        %v1051 = vpow.pop %v1050
        %v1052 = vmul.f32 %v954, 1.442695
        %v1053 = vpow.pop %v1052
        %v1054 = vmul.f32 %v955, 1.442695
        %v1055 = vpow.pop %v1054
        %v1056 = vmul.f32 %v956, 1.442695
        %v1057 = vpow.pop %v1056
        %v1058 = vmul.f32 %v957, 1.442695
        %v1059 = vpow.pop %v1058
        %v1060 = vmul.f32 %v958, 1.442695
        %v1061 = vpow.pop %v1060
        %v1062 = vmul.f32 %v959, 1.442695
        %v1063 = vpow.pop %v1062
        %v1064 = vmul.f32 %v960, 1.442695
        %v1065 = vpow.pop %v1064
        %v1066 = vmul.f32 %v961, 1.442695
        %v1067 = vpow.pop %v1066
        %v1068 = vmul.f32 %v962, 1.442695
        %v1069 = vpow.pop %v1068
        %v1070 = vmul.f32 %v963, 1.442695
        %v1071 = vpow.pop %v1070
        %v1072 = vmul.f32 %v964, 1.442695
        %v1073 = vpow.pop %v1072
        %v1074 = vmul.f32 %v965, 1.442695
        %v1075 = vpow.pop %v1074
        %v1076 = vmul.f32 %v966, 1.442695
        %v1077 = vpow.pop %v1076
        %v1078 = vmul.f32 %v967, 1.442695
        %v1079 = vpow.pop %v1078
        %v1080 = vmul.f32 %v968, 1.442695
        %v1081 = vpow.pop %v1080
        %v1082 = vmul.f32 %v969, 1.442695
        %v1083 = vpow.pop %v1082
        %v1084 = vmul.f32 %v970, 1.442695
        %v1085 = vpow.pop %v1084
        %v1086 = vmul.f32 %v971, 1.442695
        %v1087 = vpow.pop %v1086
        %v1088 = vmul.f32 %v972, 1.442695
        %v1089 = vpow.pop %v1088
        %v1090 = vmul.f32 %v973, 1.442695
        %v1091 = vpow.pop %v1090
        %v1092 = vmul.f32 %v974, 1.442695
        %v1093 = vpow.pop %v1092
        %v1094 = vmul.f32 %v975, 1.442695
        %v1095 = vpow.pop %v1094
        %v1096 = vmul.f32 %v976, 1.442695
        %v1097 = vpow.pop %v1096
        %v1098 = vmul.f32 %v977, 1.442695
        %v1099 = vpow.pop %v1098
        %v1100 = vmul.f32 %v978, 1.442695
        %v1101 = vpow.pop %v1100
        %v1102 = vmul.f32 %v979, 1.442695
        %v1103 = vpow.pop %v1102
        %v1104 = vmul.f32 %v980, 1.442695
        %v1105 = vpow.pop %v1104
        %v1106 = vmul.f32 %v981, 1.442695
        %v1107 = vpow.pop %v1106
        %v1108 = vmul.f32 %v982, 1.442695
        %v1109 = vpow.pop %v1108
        %v1110 = vmul.f32 %v983, 1.442695
        %v1111 = vpow.pop %v1110
        %v1112 = vadd.f32 %v985, %v987
        %1113 = vadd.xlane.f32.xlu0 %v1112
        %v1114 = vpop.xlane.xlu0 %1113
        %v1115 = vadd.f32 %v989, %v991
        %1116 = vadd.xlane.f32.xlu0 %v1115
        %v1117 = vpop.xlane.xlu0 %1116
        %v1118 = vadd.f32 %v993, %v995
        %1119 = vadd.xlane.f32.xlu0 %v1118
        %v1120 = vpop.xlane.xlu0 %1119
        %v1121 = vadd.f32 %v997, %v999
        %1122 = vadd.xlane.f32.xlu0 %v1121
        %v1123 = vpop.xlane.xlu0 %1122
        %v1124 = vadd.f32 %v1001, %v1003
        %1125 = vadd.xlane.f32.xlu0 %v1124
        %v1126 = vpop.xlane.xlu0 %1125
        %v1127 = vadd.f32 %v1005, %v1007
        %1128 = vadd.xlane.f32.xlu0 %v1127
        %v1129 = vpop.xlane.xlu0 %1128
        %v1130 = vadd.f32 %v1009, %v1011
        %1131 = vadd.xlane.f32.xlu0 %v1130
        %v1132 = vpop.xlane.xlu0 %1131
        %v1133 = vadd.f32 %v1013, %v1015
        %1134 = vadd.xlane.f32.xlu0 %v1133
        %v1135 = vpop.xlane.xlu0 %1134
        %v1136 = vadd.f32 %v1017, %v1019
        %1137 = vadd.xlane.f32.xlu0 %v1136
        %v1138 = vpop.xlane.xlu0 %1137
        %v1139 = vadd.f32 %v1021, %v1023
        %1140 = vadd.xlane.f32.xlu0 %v1139
        %v1141 = vpop.xlane.xlu0 %1140
        %v1142 = vadd.f32 %v1025, %v1027
        %1143 = vadd.xlane.f32.xlu0 %v1142
        %v1144 = vpop.xlane.xlu0 %1143
        %v1145 = vadd.f32 %v1029, %v1031
        %1146 = vadd.xlane.f32.xlu0 %v1145
        %v1147 = vpop.xlane.xlu0 %1146
        %v1148 = vadd.f32 %v1033, %v1035
        %1149 = vadd.xlane.f32.xlu0 %v1148
        %v1150 = vpop.xlane.xlu0 %1149
        %v1151 = vadd.f32 %v1037, %v1039
        %1152 = vadd.xlane.f32.xlu0 %v1151
        %v1153 = vpop.xlane.xlu0 %1152
        %v1154 = vadd.f32 %v1041, %v1043
        %1155 = vadd.xlane.f32.xlu0 %v1154
        %v1156 = vpop.xlane.xlu0 %1155
        %v1157 = vadd.f32 %v1045, %v1047
        %1158 = vadd.xlane.f32.xlu0 %v1157
        %v1159 = vpop.xlane.xlu0 %1158
        %v1160 = vadd.f32 %v1049, %v1051
        %1161 = vadd.xlane.f32.xlu0 %v1160
        %v1162 = vpop.xlane.xlu0 %1161
        %v1163 = vadd.f32 %v1053, %v1055
        %1164 = vadd.xlane.f32.xlu0 %v1163
        %v1165 = vpop.xlane.xlu0 %1164
        %v1166 = vadd.f32 %v1057, %v1059
        %1167 = vadd.xlane.f32.xlu0 %v1166
        %v1168 = vpop.xlane.xlu0 %1167
        %v1169 = vadd.f32 %v1061, %v1063
        %1170 = vadd.xlane.f32.xlu0 %v1169
        %v1171 = vpop.xlane.xlu0 %1170
        %v1172 = vadd.f32 %v1065, %v1067
        %1173 = vadd.xlane.f32.xlu0 %v1172
        %v1174 = vpop.xlane.xlu0 %1173
        %v1175 = vadd.f32 %v1069, %v1071
        %1176 = vadd.xlane.f32.xlu0 %v1175
        %v1177 = vpop.xlane.xlu0 %1176
        %v1178 = vadd.f32 %v1073, %v1075
        %1179 = vadd.xlane.f32.xlu0 %v1178
        %v1180 = vpop.xlane.xlu0 %1179
        %v1181 = vadd.f32 %v1077, %v1079
        %1182 = vadd.xlane.f32.xlu0 %v1181
        %v1183 = vpop.xlane.xlu0 %1182
        %v1184 = vadd.f32 %v1081, %v1083
        %1185 = vadd.xlane.f32.xlu0 %v1184
        %v1186 = vpop.xlane.xlu0 %1185
        %v1187 = vadd.f32 %v1085, %v1087
        %1188 = vadd.xlane.f32.xlu0 %v1187
        %v1189 = vpop.xlane.xlu0 %1188
        %v1190 = vadd.f32 %v1089, %v1091
        %1191 = vadd.xlane.f32.xlu0 %v1190
        %v1192 = vpop.xlane.xlu0 %1191
        %v1193 = vadd.f32 %v1093, %v1095
        %1194 = vadd.xlane.f32.xlu0 %v1193
        %v1195 = vpop.xlane.xlu0 %1194
        %v1196 = vadd.f32 %v1097, %v1099
        %1197 = vadd.xlane.f32.xlu0 %v1196
        %v1198 = vpop.xlane.xlu0 %1197
        %v1199 = vadd.f32 %v1101, %v1103
        %1200 = vadd.xlane.f32.xlu0 %v1199
        %v1201 = vpop.xlane.xlu0 %1200
        %v1202 = vadd.f32 %v1105, %v1107
        %1203 = vadd.xlane.f32.xlu0 %v1202
        %v1204 = vpop.xlane.xlu0 %1203
        %v1205 = vadd.f32 %v1109, %v1111
        %1206 = vadd.xlane.f32.xlu0 %v1205
        %v1207 = vpop.xlane.xlu0 %1206
        %v1208 = vrcp.pop %v1114
        %v1209 = vmul.f32 %v985, %v1208
        %v1210 = vmul.f32 %v987, %v1208
        %v1211 = vrcp.pop %v1117
        %v1212 = vmul.f32 %v989, %v1211
        %v1213 = vmul.f32 %v991, %v1211
        %v1214 = vrcp.pop %v1120
        %v1215 = vmul.f32 %v993, %v1214
        %v1216 = vmul.f32 %v995, %v1214
        %v1217 = vrcp.pop %v1123
        %v1218 = vmul.f32 %v997, %v1217
        %v1219 = vmul.f32 %v999, %v1217
        %v1220 = vrcp.pop %v1126
        %v1221 = vmul.f32 %v1001, %v1220
        %v1222 = vmul.f32 %v1003, %v1220
        %v1223 = vrcp.pop %v1129
        %v1224 = vmul.f32 %v1005, %v1223
        %v1225 = vmul.f32 %v1007, %v1223
        %v1226 = vrcp.pop %v1132
        %v1227 = vmul.f32 %v1009, %v1226
        %v1228 = vmul.f32 %v1011, %v1226
        %v1229 = vrcp.pop %v1135
        %v1230 = vmul.f32 %v1013, %v1229
        %v1231 = vmul.f32 %v1015, %v1229
        %v1232 = vrcp.pop %v1138
        %v1233 = vmul.f32 %v1017, %v1232
        %v1234 = vmul.f32 %v1019, %v1232
        %v1235 = vrcp.pop %v1141
        %v1236 = vmul.f32 %v1021, %v1235
        %v1237 = vmul.f32 %v1023, %v1235
        %v1238 = vrcp.pop %v1144
        %v1239 = vmul.f32 %v1025, %v1238
        %v1240 = vmul.f32 %v1027, %v1238
        %v1241 = vrcp.pop %v1147
        %v1242 = vmul.f32 %v1029, %v1241
        %v1243 = vmul.f32 %v1031, %v1241
        %v1244 = vrcp.pop %v1150
        %v1245 = vmul.f32 %v1033, %v1244
        %v1246 = vmul.f32 %v1035, %v1244
        %v1247 = vrcp.pop %v1153
        %v1248 = vmul.f32 %v1037, %v1247
        %v1249 = vmul.f32 %v1039, %v1247
        %v1250 = vrcp.pop %v1156
        %v1251 = vmul.f32 %v1041, %v1250
        %v1252 = vmul.f32 %v1043, %v1250
        %v1253 = vrcp.pop %v1159
        %v1254 = vmul.f32 %v1045, %v1253
        %v1255 = vmul.f32 %v1047, %v1253
        %v1256 = vrcp.pop %v1162
        %v1257 = vmul.f32 %v1049, %v1256
        %v1258 = vmul.f32 %v1051, %v1256
        %v1259 = vrcp.pop %v1165
        %v1260 = vmul.f32 %v1053, %v1259
        %v1261 = vmul.f32 %v1055, %v1259
        %v1262 = vrcp.pop %v1168
        %v1263 = vmul.f32 %v1057, %v1262
        %v1264 = vmul.f32 %v1059, %v1262
        %v1265 = vrcp.pop %v1171
        %v1266 = vmul.f32 %v1061, %v1265
        %v1267 = vmul.f32 %v1063, %v1265
        %v1268 = vrcp.pop %v1174
        %v1269 = vmul.f32 %v1065, %v1268
        %v1270 = vmul.f32 %v1067, %v1268
        %v1271 = vrcp.pop %v1177
        %v1272 = vmul.f32 %v1069, %v1271
        %v1273 = vmul.f32 %v1071, %v1271
        %v1274 = vrcp.pop %v1180
        %v1275 = vmul.f32 %v1073, %v1274
        %v1276 = vmul.f32 %v1075, %v1274
        %v1277 = vrcp.pop %v1183
        %v1278 = vmul.f32 %v1077, %v1277
        %v1279 = vmul.f32 %v1079, %v1277
        %v1280 = vrcp.pop %v1186
        %v1281 = vmul.f32 %v1081, %v1280
        %v1282 = vmul.f32 %v1083, %v1280
        %v1283 = vrcp.pop %v1189
        %v1284 = vmul.f32 %v1085, %v1283
        %v1285 = vmul.f32 %v1087, %v1283
        %v1286 = vrcp.pop %v1192
        %v1287 = vmul.f32 %v1089, %v1286
        %v1288 = vmul.f32 %v1091, %v1286
        %v1289 = vrcp.pop %v1195
        %v1290 = vmul.f32 %v1093, %v1289
        %v1291 = vmul.f32 %v1095, %v1289
        %v1292 = vrcp.pop %v1198
        %v1293 = vmul.f32 %v1097, %v1292
        %v1294 = vmul.f32 %v1099, %v1292
        %v1295 = vrcp.pop %v1201
        %v1296 = vmul.f32 %v1101, %v1295
        %v1297 = vmul.f32 %v1103, %v1295
        %v1298 = vrcp.pop %v1204
        %v1299 = vmul.f32 %v1105, %v1298
        %v1300 = vmul.f32 %v1107, %v1298
        %v1301 = vrcp.pop %v1207
        %v1302 = vmul.f32 %v1109, %v1301
        %v1303 = vmul.f32 %v1111, %v1301
        %v1304 = vpack.c.bf16 %v525, %v521
        %v1305 = vpack.c.bf16 %v527, %v523
        %v1306 = vpack.c.bf16 %v535, %v531
        %v1307 = vpack.c.bf16 %v537, %v533
        %v1308 = vpack.c.bf16 %v1212, %v1209
        %v1309 = vpack.c.bf16 %v1213, %v1210
        %v1310 = vpack.c.bf16 %v1218, %v1215
        %v1311 = vpack.c.bf16 %v1219, %v1216
        %v1312 = vpack.c.bf16 %v1224, %v1221
        %v1313 = vpack.c.bf16 %v1225, %v1222
        %v1314 = vpack.c.bf16 %v1230, %v1227
        %v1315 = vpack.c.bf16 %v1231, %v1228
        %v1316 = vpack.c.bf16 %v1236, %v1233
        %v1317 = vpack.c.bf16 %v1237, %v1234
        %v1318 = vpack.c.bf16 %v1242, %v1239
        %v1319 = vpack.c.bf16 %v1243, %v1240
        %v1320 = vpack.c.bf16 %v1248, %v1245
        %v1321 = vpack.c.bf16 %v1249, %v1246
        %v1322 = vpack.c.bf16 %v1254, %v1251
        %v1323 = vpack.c.bf16 %v1255, %v1252
        %v1324 = vpack.c.bf16 %v1260, %v1257
        %v1325 = vpack.c.bf16 %v1261, %v1258
        %v1326 = vpack.c.bf16 %v1266, %v1263
        %v1327 = vpack.c.bf16 %v1267, %v1264
        %v1328 = vpack.c.bf16 %v1272, %v1269
        %v1329 = vpack.c.bf16 %v1273, %v1270
        %v1330 = vpack.c.bf16 %v1278, %v1275
        %v1331 = vpack.c.bf16 %v1279, %v1276
        %v1332 = vpack.c.bf16 %v1284, %v1281
        %v1333 = vpack.c.bf16 %v1285, %v1282
        %v1334 = vpack.c.bf16 %v1290, %v1287
        %v1335 = vpack.c.bf16 %v1291, %v1288
        %v1336 = vpack.c.bf16 %v1296, %v1293
        %v1337 = vpack.c.bf16 %v1297, %v1294
        %v1338 = vpack.c.bf16 %v1302, %v1299
        %v1339 = vpack.c.bf16 %v1303, %v1300
        %1340 = vmatprep.subr.bf16.mxu0 %v1323
        %1341 = vmatpush1.bf16.xpose.msra.mxu0 %v1322
        %1342 = vmatprep.subr.bf16.mxu0 %v1321
        %1343 = vmatpush1.bf16.xpose.msra.mxu0 %v1320
        %1344 = vmatprep.subr.bf16.mxu0 %v1319
        %1345 = vmatpush1.bf16.xpose.msra.mxu0 %v1318
        %1346 = vmatprep.subr.bf16.mxu0 %v1317
        %1347 = vmatpush1.bf16.xpose.msra.mxu0 %v1316
        %1348 = vmatprep.subr.bf16.mxu0 %v1315
        %1349 = vmatpush1.bf16.xpose.msra.mxu0 %v1314
        %1350 = vmatprep.subr.bf16.mxu0 %v1313
        %1351 = vmatpush1.bf16.xpose.msra.mxu0 %v1312
        %1352 = vmatprep.subr.bf16.mxu0 %v1311
        %1353 = vmatpush1.bf16.xpose.msra.mxu0 %v1310
        %1354 = vmatprep.subr.bf16.mxu0 %v1309
        %1355 = vmatpush1.bf16.xpose.msra.mxu0 %v1308
        %1356 = vmatprep.subr.bf16.mxu0 %v1339
        %1357 = vmatpush2.bf16.xpose.msra.mxu0 %v1338
        %1358 = vmatprep.subr.bf16.mxu0 %v1337
        %1359 = vmatpush2.bf16.xpose.msra.mxu0 %v1336
        %1360 = vmatprep.subr.bf16.mxu0 %v1335
        %1361 = vmatpush2.bf16.xpose.msra.mxu0 %v1334
        %1362 = vmatprep.subr.bf16.mxu0 %v1333
        %1363 = vmatpush2.bf16.xpose.msra.mxu0 %v1332
        %1364 = vmatprep.subr.bf16.mxu0 %v1331
        %1365 = vmatpush2.bf16.xpose.msra.mxu0 %v1330
        %1366 = vmatprep.subr.bf16.mxu0 %v1329
        %1367 = vmatpush2.bf16.xpose.msra.mxu0 %v1328
        %1368 = vmatprep.subr.bf16.mxu0 %v1327
        %1369 = vmatpush2.bf16.xpose.msra.mxu0 %v1326
        %1370 = vmatprep.subr.bf16.mxu0 %v1325
        %1371 = vmatpush2.bf16.xpose.msra.mxu0 %v1324
        %1372 = vmatprep.mubr.bf16.mxu0 %v1305
        %1373 = vmatmul.mubr.bf16.gmra.mxu0 %v1304
        %v1374 = vpop.f32.mrf.mxu0
        %v1375 = vadd.f32 0.0, %v1374
        %v1376 = vpop.f32.mrf.mxu0
        %v1377 = vadd.f32 0.0, %v1376
        %v1378 = vpop.f32.mrf.mxu0
        %v1379 = vadd.f32 0.0, %v1378
        %v1380 = vpop.f32.mrf.mxu0
        %v1381 = vadd.f32 0.0, %v1380
        %1382 = vmatprep.mubr.bf16.mxu0 %v1307
        %1383 = vmatmul.mubr.bf16.gmra.mxu0 %v1306
        %v1384 = vpop.f32.mrf.mxu0
        %v1385 = vadd.f32 0.0, %v1384
        %v1386 = vpop.f32.mrf.mxu0
        %v1387 = vadd.f32 0.0, %v1386
        %v1388 = vpop.f32.mrf.mxu0
        %v1389 = vadd.f32 0.0, %v1388
        %v1390 = vpop.f32.mrf.mxu0
        %v1391 = vadd.f32 0.0, %v1390
        %1392 = vdwg.mxu0
        %v1393 = vld [vmem:[#allocation2] sm:$0x1]
        %v1395 = vlaneseq
        %v1396 = vshrl.u32 %v1395, 7
        %v1397 = vsub.s32 0, %v1396
        %v1398 = vrot.slane %v1393, %v1397
        %1399 = vset.pattern.permute.xlu0 0
        %1400 = vperm.xlu0 %1399, %v1398
        %v1401 = vpop.permute.xlu0 %1400
        %v1403 = vmul.f32 %v1401, %v1375
        %v1404 = vmul.f32 %v1401, %v1377
        %v1405 = vmul.f32 %v1401, %v1379
        %v1406 = vmul.f32 %v1401, %v1381
        %v1407 = vmul.f32 %v1401, %v1385
        %v1408 = vmul.f32 %v1401, %v1387
        %v1409 = vmul.f32 %v1401, %v1389
        %v1410 = vmul.f32 %v1401, %v1391
        %v1411 = vadd.f32 %v1403, %v327
        %v1412 = vadd.f32 %v1404, %v328
        %v1413 = vadd.f32 %v1405, %v329
        %v1414 = vadd.f32 %v1406, %v330
        %v1415 = vadd.f32 %v1407, %v331
        %v1416 = vadd.f32 %v1408, %v332
        %v1417 = vadd.f32 %v1409, %v333
        %v1418 = vadd.f32 %v1410, %v334
        %1419 = vst [vmem:[%s325] sm:$0xff] %v1411
        %1420 = vst [vmem:[%s325 + $0x8] sm:$0xff] %v1412
        %1421 = vst [vmem:[%s325 + $0x10] sm:$0xff] %v1413
        %1422 = vst [vmem:[%s325 + $0x18] sm:$0xff] %v1414
        %1423 = vst [vmem:[%s325 + $0x20] sm:$0xff] %v1415
        %1424 = vst [vmem:[%s325 + $0x28] sm:$0xff] %v1416
        %1425 = vst [vmem:[%s325 + $0x30] sm:$0xff] %v1417
        %1426 = vst [vmem:[%s325 + $0x38] sm:$0xff] %v1418
        %s1427 = sand.u32 %s208, 1
        %s1428 = scalar_lea.sflag [#allocation5], %s1427
        %s1429 = sand.u32 %s208, 1
        %s1430 = smul.addr %s1429, 64
        %s1431 = scalar_lea.vmem [#allocation6], %s1430
        // Predicated region
        $region57: #{tpu_custom_call.1} parent=51 // pred_check
          %p1432 = pneg %p218
        $region58: #{tpu_custom_call.1} parent=51 // pred_check_branch
          %1434 = sbr.rel (%p1432) target = $region60
        $region59: #{tpu_custom_call.1} parent=51 // pred_region
          %s1436 = ssub.s32 1024, 1024
          %1437 = vsyncadd %s1428, %s1436
          %s1438 = smul.addr %s27, 8
          %s1439 = smul.addr %s1438, 128
          %s1440 = scalar_lea.hbm %s8, %s1439
          %s1441 = sshll.u32 %s1431, 4
          %s1442 = int_to_ptr.vmem [resolvable:$true] %s1441
          %1447 = dma.vmem_to_hbm [thread:$0]  %s1442, 1024, %s1440, %s1428, 256, 256, 16
        $region60: #{tpu_custom_call.1} parent=51 // pred_fallthru
          _
      $region52: #{tpu_custom_call.1} parent=5 // pred_fallthru
        _
      %p1448 = scmp.le.s32.totalorder 2, %s22
      // Predicated region
      $region61: #{tpu_custom_call.1} parent=5 // pred_check
        %p1449 = pneg %p1448
      $region62: #{tpu_custom_call.1} parent=5 // pred_check_branch
        %1451 = sbr.rel (%p1449) target = $region64
      $region63: #{tpu_custom_call.1} parent=5 // pred_region
        %s1452 = ssub.s32 %s22, 2
        // Predicated region
        $region65: #{tpu_custom_call.1} parent=63 // pred_check
          %p1453 = pneg %p224
        $region66: #{tpu_custom_call.1} parent=63 // pred_check_branch
          %1455 = sbr.rel (%p1453) target = $region68
        $region67: #{tpu_custom_call.1} parent=63 // pred_region
          %s1456 = sand.u32 %s209, 1
          %s1457 = scalar_lea.sflag [#allocation5], %s1456
          %s1458 = sand.u32 %s209, 1
          %s1459 = smul.addr %s1458, 64
          %s1460 = scalar_lea.vmem [#allocation6], %s1459
          %1461 = dma.done %s1457, 1024
        $region68: #{tpu_custom_call.1} parent=63 // pred_fallthru
          _
      $region64: #{tpu_custom_call.1} parent=5 // pred_fallthru
        _
    $region6: #{tpu_custom_call.1} parent=1 // loop_footer
      %s26 = sadd.s32 1, %s22
    $region7: #{tpu_custom_call.1} parent=1 // loop_footer_branch
      %21 = sbr.rel target = $region3
    $region8: #{tpu_custom_call.1} parent=1 // loop_exit
      _
    %1462 = vsyncpa [#allocation4], 1
    %s1463 = scalar_lea.sflag [#allocation4], 1
    %1464 = vsyncpa %s1463, 1
    %1465 = vsyncpa [#allocation5], 1
    %s1466 = scalar_lea.sflag [#allocation5], 1
    %1467 = vsyncpa %s1466, 1

</llo_original>
